<compile_context>
chip_gen: v6e
topology: v6e:2x2x1
jax: 0.10.0
libtpu: 0.0.40
codegen_flags: <defaults>
</compile_context>

<pallas_src>
import functools
import math

import jax
import jax.numpy as jnp
from jax import lax
from jax.experimental import pallas as pl
from jax.experimental.pallas import tpu as pltpu


_NEG_INF = -1e30  # finite "minus infinity" used for KV masking


def _default_vmem_limit():
    """~3/4 of per-core VMEM, capped at 96 MiB (v5e/v6e) / ~48 MiB (v7x)."""
    try:
        cap = pltpu.get_tpu_info().vmem_capacity_bytes
    except Exception:
        return 48 * 1024 * 1024
    return int(max(32 * 1024 * 1024, min(cap * 3 // 4, 96 * 1024 * 1024)))


def _heads_per_group(num_heads, head_dim):
    """Pack heads so a group's width is a multiple of 128 lanes (lane-dense blocks).

    Falls back to one full-width group (group_width == hidden_size), which is always
    legal as a block last-dim because it equals the full array dim.
    """
    if head_dim % 128 == 0:
        return 1
    for k in range(1, num_heads + 1):
        if num_heads % k == 0 and (k * head_dim) % 128 == 0:
            return k
    return num_heads


# ---------------------------------------------------------------------------
# Stage 1: fused QKV projection + in-kernel head split.
#   x (B, S, H) @ [Wq|Wk|Wv] (H, 3H)  (softmax scale folded into Wq/bq)
#   -> q, k, v each (B, G, S, gw)   with G = num groups, gw = heads_per_group * dh.
# ---------------------------------------------------------------------------
def _qkv_split_kernel(x_ref, w_ref, b_ref, q_ref, k_ref, v_ref, *,
                      hidden_size, num_groups, group_width):
    y = jnp.dot(x_ref[0], w_ref[...], preferred_element_type=jnp.float32)
    y = y + b_ref[...].astype(jnp.float32)                       # (tr, 3H)
    H = hidden_size
    for g in range(num_groups):                                  # static unroll
        lo = g * group_width
        hi = (g + 1) * group_width
        q_ref[0, g] = y[:, lo:hi].astype(q_ref.dtype)
        k_ref[0, g] = y[:, H + lo:H + hi].astype(k_ref.dtype)
        v_ref[0, g] = y[:, 2 * H + lo:2 * H + hi].astype(v_ref.dtype)


def _qkv_projection(x, w_qkv, b_qkv, *, num_groups, group_width, block_rows,
                    vmem_limit):
    B, S, H = x.shape
    tr = min(block_rows, S)                                      # mult of 8/16 or full S
    grid = (B, pl.cdiv(S, tr))
    isz = x.dtype.itemsize
    kernel = functools.partial(_qkv_split_kernel, hidden_size=H,
                               num_groups=num_groups, group_width=group_width)
    out_shape = tuple(
        jax.ShapeDtypeStruct((B, num_groups, S, group_width), x.dtype)
        for _ in range(3))
    head_spec = pl.BlockSpec((1, num_groups, tr, group_width),
                             lambda b, si: (b, 0, si, 0))
    return pl.pallas_call(
        kernel,
        out_shape=out_shape,
        grid_spec=pltpu.PrefetchScalarGridSpec(
            num_scalar_prefetch=0,
            grid=grid,
            in_specs=[
                pl.BlockSpec((1, tr, H), lambda b, si: (b, si, 0)),   # activations
                pl.BlockSpec((H, 3 * H), lambda b, si: (0, 0)),       # resident weight
                pl.BlockSpec((1, 3 * H), lambda b, si: (0, 0)),       # bias
            ],
            out_specs=[head_spec, head_spec, head_spec],
        ),
        compiler_params=pltpu.CompilerParams(
            dimension_semantics=("parallel", "parallel"),
            vmem_limit_bytes=vmem_limit),
        cost_estimate=pl.CostEstimate(
            flops=2 * B * S * H * 3 * H,
            transcendentals=0,
            bytes_accessed=(B * S * H + 3 * H * H + 3 * H + 3 * B * S * H) * isz),
    )(x, w_qkv, b_qkv)


# ---------------------------------------------------------------------------
# Stage 2: flash attention with online softmax over KV tiles.
#   q, k, v: (B, G, S, gw);  softmax scale already folded into q.
#   Output written directly in (B, S, H) layout (head merge fused into out_spec).
# ---------------------------------------------------------------------------
def _flash_kernel(q_ref, k_ref, v_ref, o_ref, m_ref, l_ref, acc_ref, *,
                  head_dim, heads_per_group, seq_len, block_kv, mask_kv):
    kv = pl.program_id(3)

    @pl.when(kv == 0)
    def _():
        m_ref[...] = jnp.full_like(m_ref, -jnp.inf)
        l_ref[...] = jnp.zeros_like(l_ref)
        acc_ref[...] = jnp.zeros_like(acc_ref)

    q = q_ref[0, 0]                                              # (tq, gw)
    k = k_ref[0, 0]                                              # (tk, gw)
    v = v_ref[0, 0]                                              # (tk, gw)

    if mask_kv:
        kv_pos = kv * block_kv + lax.broadcasted_iota(jnp.int32, (1, k.shape[0]), 1)
        kv_valid = kv_pos < seq_len                              # (1, tk)

    for j in range(heads_per_group):                             # static unroll
        sl = slice(j * head_dim, (j + 1) * head_dim)
        qj = q[:, sl]
        kj = k[:, sl]
        vj = v[:, sl]
        # q . k^T contracting last axes (no materialized k.T).
        s = lax.dot_general(qj, kj, (((1,), (1,)), ((), ())),
                            preferred_element_type=jnp.float32)  # (tq, tk)
        if mask_kv:
            s = jnp.where(kv_valid, s, _NEG_INF)

        m_prev = m_ref[:, j:j + 1]                               # (tq, 1)
        m_new = jnp.maximum(m_prev, jnp.max(s, axis=-1, keepdims=True))
        alpha = jnp.exp(m_prev - m_new)                          # (tq, 1)
        p = jnp.exp(s - m_new)                                   # (tq, tk)
        l_ref[:, j:j + 1] = alpha * l_ref[:, j:j + 1] + jnp.sum(p, axis=-1,
                                                                keepdims=True)
        acc_ref[:, sl] = alpha * acc_ref[:, sl] + jnp.dot(
            p.astype(vj.dtype), vj, preferred_element_type=jnp.float32)
        m_ref[:, j:j + 1] = m_new

    @pl.when(kv == pl.num_programs(3) - 1)
    def _():
        parts = []
        for j in range(heads_per_group):
            sl = slice(j * head_dim, (j + 1) * head_dim)
            parts.append(acc_ref[:, sl] / l_ref[:, j:j + 1])     # exact divide
        full = parts[0] if heads_per_group == 1 else jnp.concatenate(parts, axis=-1)
        o_ref[0] = full.astype(o_ref.dtype)                      # lane-dense store


def _flash_attention(q, k, v, *, hidden_size, head_dim, heads_per_group,
                     block_q, block_kv, vmem_limit):
    B, G, S, gw = q.shape
    tq = min(block_q, S)
    tk = min(block_kv, S)
    grid = (B, G, pl.cdiv(S, tq), pl.cdiv(S, tk))
    mask_kv = (S % tk) != 0                                      # ragged edge KV block
    isz = q.dtype.itemsize
    kernel = functools.partial(_flash_kernel, head_dim=head_dim,
                               heads_per_group=heads_per_group, seq_len=S,
                               block_kv=tk, mask_kv=mask_kv)
    nh = G * heads_per_group
    return pl.pallas_call(
        kernel,
        out_shape=jax.ShapeDtypeStruct((B, S, hidden_size), q.dtype),
        grid_spec=pltpu.PrefetchScalarGridSpec(
            num_scalar_prefetch=0,
            grid=grid,
            in_specs=[
                pl.BlockSpec((1, 1, tq, gw), lambda b, g, qi, ki: (b, g, qi, 0)),
                pl.BlockSpec((1, 1, tk, gw), lambda b, g, qi, ki: (b, g, ki, 0)),
                pl.BlockSpec((1, 1, tk, gw), lambda b, g, qi, ki: (b, g, ki, 0)),
            ],
            # Head-group g lands directly in columns [g*gw:(g+1)*gw] of (B, S, H):
            # the context-layer merge transpose is fused into this out_spec.
            out_specs=pl.BlockSpec((1, tq, gw), lambda b, g, qi, ki: (b, qi, g)),
            scratch_shapes=[
                pltpu.VMEM((tq, heads_per_group), jnp.float32),   # running max
                pltpu.VMEM((tq, heads_per_group), jnp.float32),   # running sum
                pltpu.VMEM((tq, gw), jnp.float32),                # accumulator
            ],
        ),
        compiler_params=pltpu.CompilerParams(
            dimension_semantics=("parallel", "parallel", "parallel", "arbitrary"),
            vmem_limit_bytes=vmem_limit),
        cost_estimate=pl.CostEstimate(
            flops=4 * B * nh * S * S * head_dim,
            transcendentals=B * nh * S * S,
            bytes_accessed=(3 * B * G * S * gw + B * S * hidden_size) * isz),
    )(q, k, v)


# ---------------------------------------------------------------------------
# Stage 3: output projection (ViViTSelfOutput.dense), row-tiled dense layer.
# ---------------------------------------------------------------------------
def _linear_kernel(x_ref, w_ref, b_ref, o_ref):
    y = jnp.dot(x_ref[...], w_ref[...], preferred_element_type=jnp.float32)
    y = y + b_ref[...].astype(jnp.float32)
    o_ref[...] = y.astype(o_ref.dtype)


def _linear(x, w, b, *, block_rows, vmem_limit):
    rows, kdim = x.shape
    n = w.shape[1]
    tr = min(block_rows, rows)
    isz = x.dtype.itemsize
    return pl.pallas_call(
        _linear_kernel,
        out_shape=jax.ShapeDtypeStruct((rows, n), x.dtype),
        grid_spec=pltpu.PrefetchScalarGridSpec(
            num_scalar_prefetch=0,
            grid=(pl.cdiv(rows, tr),),
            in_specs=[
                pl.BlockSpec((tr, kdim), lambda i: (i, 0)),      # activations
                pl.BlockSpec((kdim, n), lambda i: (0, 0)),       # resident weight
                pl.BlockSpec((1, n), lambda i: (0, 0)),          # bias
            ],
            out_specs=pl.BlockSpec((tr, n), lambda i: (i, 0)),
        ),
        compiler_params=pltpu.CompilerParams(
            dimension_semantics=("parallel",),
            vmem_limit_bytes=vmem_limit),
        cost_estimate=pl.CostEstimate(
            flops=2 * rows * kdim * n,
            transcendentals=0,
            bytes_accessed=(rows * kdim + kdim * n + n + rows * n) * isz),
    )(x, w, b)


# ---------------------------------------------------------------------------
# Parameter preprocessing (hoisted OUT of the jitted forward; f32 scale fold).
# ---------------------------------------------------------------------------
def prepare_params(params, num_heads):
    """Fold 1/sqrt(head_dim) into Wq/bq and fuse [Wq|Wk|Wv] once, in f32."""
    H = params["wq"].shape[0]
    assert H % num_heads == 0
    dh = H // num_heads
    scale = 1.0 / math.sqrt(dh)
    f32 = jnp.float32
    wq = params["wq"].astype(f32).T * scale
    bq = params["bq"].astype(f32) * scale
    w_qkv = jnp.concatenate(
        [wq, params["wk"].astype(f32).T, params["wv"].astype(f32).T], axis=1)
    b_qkv = jnp.concatenate(
        [bq, params["bk"].astype(f32), params["bv"].astype(f32)]).reshape(1, 3 * H)
    wdtype = params["wq"].dtype
    return {
        "w_qkv": w_qkv.astype(wdtype),           # (H, 3H), scale folded
        "b_qkv": b_qkv,                          # (1, 3H) f32 (added in f32 in-kernel)
        "wo": params["wo"].astype(f32).T.astype(wdtype),   # (H, H)
        "bo": params["bo"].astype(f32).reshape(1, H),      # (1, H) f32
    }


# ---------------------------------------------------------------------------
# ViViTAttention forward (eval mode).
# ---------------------------------------------------------------------------
def vivit_attention(hidden_states, prepared, *, num_heads,
                    block_q=128, block_kv=256, block_rows=512):
    """hidden_states: (B, S, H).  prepared: output of prepare_params()."""
    B, S, H = hidden_states.shape
    assert H % num_heads == 0
    dh = H // num_heads
    hpg = _heads_per_group(num_heads, dh)        # heads packed per lane-dense group
    G = num_heads // hpg
    gw = hpg * dh
    vmem_limit = _default_vmem_limit()

    # 1) Fused QKV projection; head split done in-kernel (no XLA transposes).
    q, k, v = _qkv_projection(hidden_states, prepared["w_qkv"], prepared["b_qkv"],
                              num_groups=G, group_width=gw,
                              block_rows=block_rows, vmem_limit=vmem_limit)

    # 2) Flash attention; writes directly into (B, S, H) (head merge fused).
    ctx = _flash_attention(q, k, v, hidden_size=H, head_dim=dh,
                           heads_per_group=hpg, block_q=block_q,
                           block_kv=block_kv, vmem_limit=vmem_limit)

    # 3) Output projection (dropout = identity in eval mode).
    out = _linear(ctx.reshape(B * S, H), prepared["wo"], prepared["bo"],
                  block_rows=block_rows, vmem_limit=vmem_limit)
    return out.reshape(B, S, H)


def _reference(hidden_states, params, *, num_heads):
    """Pure-JAX reference mirroring the PyTorch forward."""
    B, S, H = hidden_states.shape
    dh = H // num_heads
    x = hidden_states

    def lin(x, w, b):
        return jnp.einsum("bsh,oh->bso", x, w) + b

    q = lin(x, params["wq"], params["bq"]).reshape(B, S, num_heads, dh).transpose(0, 2, 1, 3)
    k = lin(x, params["wk"], params["bk"]).reshape(B, S, num_heads, dh).transpose(0, 2, 1, 3)
    v = lin(x, params["wv"], params["bv"]).reshape(B, S, num_heads, dh).transpose(0, 2, 1, 3)
    scores = jnp.einsum("bhqd,bhkd->bhqk", q, k) / math.sqrt(dh)
    probs = jax.nn.softmax(scores, axis=-1)
    ctx = jnp.einsum("bhqk,bhkd->bhqd", probs, v)
    ctx = ctx.transpose(0, 2, 1, 3).reshape(B, S, H)
    return lin(ctx, params["wo"], params["bo"])


if __name__ == "__main__":
    root = jax.random.PRNGKey(0)

    def run_case(B, S, H, num_heads, case_key):
        ks = jax.random.split(case_key, 9)
        sc = 0.02
        params = {
            "wq": sc * jax.random.normal(ks[0], (H, H), jnp.float32),
            "bq": sc * jax.random.normal(ks[1], (H,), jnp.float32),
            "wk": sc * jax.random.normal(ks[2], (H, H), jnp.float32),
            "bk": sc * jax.random.normal(ks[3], (H,), jnp.float32),
            "wv": sc * jax.random.normal(ks[4], (H, H), jnp.float32),
            "bv": sc * jax.random.normal(ks[5], (H,), jnp.float32),
            "wo": sc * jax.random.normal(ks[6], (H, H), jnp.float32),
            "bo": sc * jax.random.normal(ks[7], (H,), jnp.float32),
        }
        x = jax.random.normal(ks[8], (B, S, H), jnp.float32)

        prepared = prepare_params(params, num_heads)             # hoisted, f32 fold
        attn = jax.jit(functools.partial(vivit_attention, num_heads=num_heads))
        out = jax.block_until_ready(attn(x, prepared))

        ref = _reference(x, params, num_heads=num_heads)
        assert out.shape == (B, S, H)
        assert jnp.allclose(out, ref, atol=2e-3, rtol=2e-3), \
            f"mismatch vs reference for config {(B, S, H, num_heads)}"

    k1, k2 = jax.random.split(root)
    # Small config consistent with the module: hidden=32, heads=4, batch=2, seq=8
    # (head_dim=8 -> single full-width head group).
    run_case(2, 8, 32, 4, k1)
    # head_dim=64 config: 2 heads packed per 128-lane group, 2 groups.
    run_case(1, 16, 256, 4, k2)

    print("KERNEL_OK")
</pallas_src>

<mosaic_0001>
module attributes {stable_mosaic.version = 11 : i64} {
  func.func @_linear_kernel(%arg0: i32, %arg1: memref<16x32xf32, #tpu.memory_space<vmem>>, %arg2: memref<32x32xf32, #tpu.memory_space<vmem>>, %arg3: memref<1x32xf32, #tpu.memory_space<vmem>>, %arg4: memref<16x32xf32, #tpu.memory_space<vmem>>) attributes {dimension_semantics = [#tpu.dimension_semantics<parallel>], iteration_bounds = array<i64: 1>, scalar_prefetch = 0 : i64, scratch_operands = 0 : i64, tpu.core_type = #tpu.core_type<tc>, window_params = [{transform_indices = @transform_0, window_bounds = array<i64: 16, 32>}, {pipeline_mode = #tpu.pipeline_mode<synchronous>, transform_indices = @transform_1, window_bounds = array<i64: 32, 32>}, {pipeline_mode = #tpu.pipeline_mode<synchronous>, transform_indices = @transform_2, window_bounds = array<i64: 1, 32>}, {transform_indices = @transform_3, window_bounds = array<i64: 16, 32>}]} {
    %c0 = arith.constant 0 : index
    %c0_0 = arith.constant 0 : index
    %0 = vector.load %arg1[%c0, %c0_0] : memref<16x32xf32, #tpu.memory_space<vmem>>, vector<16x32xf32>
    %c0_1 = arith.constant 0 : index
    %c0_2 = arith.constant 0 : index
    %1 = vector.load %arg2[%c0_1, %c0_2] : memref<32x32xf32, #tpu.memory_space<vmem>>, vector<32x32xf32>
    %cst = arith.constant dense<0.000000e+00> : vector<16x32xf32>
    %2 = tpu.matmul %0, %1, %cst {dimension_numbers = #tpu.dot_dimension_numbers<[1], [0], [0], [1], [0, 0, 1, 1], [], []>} : vector<16x32xf32>, vector<32x32xf32>, vector<16x32xf32> -> vector<16x32xf32>
    %c0_3 = arith.constant 0 : index
    %c0_4 = arith.constant 0 : index
    %3 = vector.load %arg3[%c0_3, %c0_4] : memref<1x32xf32, #tpu.memory_space<vmem>>, vector<1x32xf32>
    %4 = vector.broadcast %3 : vector<1x32xf32> to vector<16x32xf32>
    %5 = arith.addf %2, %4 : vector<16x32xf32>
    %c0_5 = arith.constant 0 : index
    %c0_6 = arith.constant 0 : index
    %6 = vector.load %arg4[%c0_5, %c0_6] : memref<16x32xf32, #tpu.memory_space<vmem>>, vector<16x32xf32>
    tpu.vector_store %arg4[%c0_5, %c0_6], %5 {strides = array<i32>} : memref<16x32xf32, #tpu.memory_space<vmem>>, vector<16x32xf32>,
    return
  }
  func.func @transform_0(%arg0: i32) -> (i32, i32) {
    %c0_i32 = arith.constant 0 : i32
    %c0_i32_0 = arith.constant 0 : i32
    return %arg0, %c0_i32 : i32, i32
  }
  func.func @transform_1(%arg0: i32) -> (i32, i32) {
    %c0_i32 = arith.constant 0 : i32
    %c0_i32_0 = arith.constant 0 : i32
    %c0_i32_1 = arith.constant 0 : i32
    return %c0_i32, %c0_i32_0 : i32, i32
  }
  func.func @transform_2(%arg0: i32) -> (i32, i32) {
    %c0_i32 = arith.constant 0 : i32
    %c0_i32_0 = arith.constant 0 : i32
    %c0_i32_1 = arith.constant 0 : i32
    return %c0_i32, %c0_i32_0 : i32, i32
  }
  func.func @transform_3(%arg0: i32) -> (i32, i32) {
    %c0_i32 = arith.constant 0 : i32
    %c0_i32_0 = arith.constant 0 : i32
    return %arg0, %c0_i32 : i32, i32
  }
}

module attributes {stable_mosaic.version = 11 : i64} {
  func.func @_qkv_split_kernel(%arg0: i32, %arg1: i32, %arg2: memref<1x8x32xf32, #tpu.memory_space<vmem>>, %arg3: memref<32x96xf32, #tpu.memory_space<vmem>>, %arg4: memref<1x96xf32, #tpu.memory_space<vmem>>, %arg5: memref<1x1x8x32xf32, #tpu.memory_space<vmem>>, %arg6: memref<1x1x8x32xf32, #tpu.memory_space<vmem>>, %arg7: memref<1x1x8x32xf32, #tpu.memory_space<vmem>>) attributes {dimension_semantics = [#tpu.dimension_semantics<parallel>, #tpu.dimension_semantics<parallel>], iteration_bounds = array<i64: 2, 1>, scalar_prefetch = 0 : i64, scratch_operands = 0 : i64, tpu.core_type = #tpu.core_type<tc>, window_params = [{transform_indices = @transform_0, window_bounds = array<i64: 1, 8, 32>}, {pipeline_mode = #tpu.pipeline_mode<synchronous>, transform_indices = @transform_1, window_bounds = array<i64: 32, 96>}, {pipeline_mode = #tpu.pipeline_mode<synchronous>, transform_indices = @transform_2, window_bounds = array<i64: 1, 96>}, {transform_indices = @transform_3, window_bounds = array<i64: 1, 1, 8, 32>}, {transform_indices = @transform_4, window_bounds = array<i64: 1, 1, 8, 32>}, {transform_indices = @transform_5, window_bounds = array<i64: 1, 1, 8, 32>}]} {
    %c0 = arith.constant 0 : index
    %c0_0 = arith.constant 0 : index
    %c0_1 = arith.constant 0 : index
    %0 = vector.load %arg2[%c0, %c0_0, %c0_1] : memref<1x8x32xf32, #tpu.memory_space<vmem>>, vector<1x8x32xf32>
    %1 = vector.shape_cast %0 : vector<1x8x32xf32> to vector<8x32xf32>
    %c0_2 = arith.constant 0 : index
    %c0_3 = arith.constant 0 : index
    %2 = vector.load %arg3[%c0_2, %c0_3] : memref<32x96xf32, #tpu.memory_space<vmem>>, vector<32x96xf32>
    %cst = arith.constant dense<0.000000e+00> : vector<8x96xf32>
    %3 = tpu.matmul %1, %2, %cst {dimension_numbers = #tpu.dot_dimension_numbers<[1], [0], [0], [1], [0, 0, 1, 1], [], []>} : vector<8x32xf32>, vector<32x96xf32>, vector<8x96xf32> -> vector<8x96xf32>
    %c0_4 = arith.constant 0 : index
    %c0_5 = arith.constant 0 : index
    %4 = vector.load %arg4[%c0_4, %c0_5] : memref<1x96xf32, #tpu.memory_space<vmem>>, vector<1x96xf32>
    %5 = vector.broadcast %4 : vector<1x96xf32> to vector<8x96xf32>
    %6 = arith.addf %3, %5 : vector<8x96xf32>
    %7 = vector.extract_strided_slice %6 {offsets = [0, 0], sizes = [8, 32], strides = [1, 1]} : vector<8x96xf32> to vector<8x32xf32>
    %c0_6 = arith.constant 0 : index
    %c0_7 = arith.constant 0 : index
    %c0_8 = arith.constant 0 : index
    %c0_9 = arith.constant 0 : index
    %8 = vector.load %arg5[%c0_6, %c0_7, %c0_8, %c0_9] : memref<1x1x8x32xf32, #tpu.memory_space<vmem>>, vector<1x1x8x32xf32>
    %9 = vector.shape_cast %8 : vector<1x1x8x32xf32> to vector<8x32xf32>
    %10 = vector.shape_cast %7 : vector<8x32xf32> to vector<1x1x8x32xf32>
    tpu.vector_store %arg5[%c0_6, %c0_7, %c0_8, %c0_9], %10 {strides = array<i32>} : memref<1x1x8x32xf32, #tpu.memory_space<vmem>>, vector<1x1x8x32xf32>,
    %11 = vector.extract_strided_slice %6 {offsets = [0, 32], sizes = [8, 32], strides = [1, 1]} : vector<8x96xf32> to vector<8x32xf32>
    %c0_10 = arith.constant 0 : index
    %c0_11 = arith.constant 0 : index
    %c0_12 = arith.constant 0 : index
    %c0_13 = arith.constant 0 : index
    %12 = vector.load %arg6[%c0_10, %c0_11, %c0_12, %c0_13] : memref<1x1x8x32xf32, #tpu.memory_space<vmem>>, vector<1x1x8x32xf32>
    %13 = vector.shape_cast %12 : vector<1x1x8x32xf32> to vector<8x32xf32>
    %14 = vector.shape_cast %11 : vector<8x32xf32> to vector<1x1x8x32xf32>
    tpu.vector_store %arg6[%c0_10, %c0_11, %c0_12, %c0_13], %14 {strides = array<i32>} : memref<1x1x8x32xf32, #tpu.memory_space<vmem>>, vector<1x1x8x32xf32>,
    %15 = vector.extract_strided_slice %6 {offsets = [0, 64], sizes = [8, 32], strides = [1, 1]} : vector<8x96xf32> to vector<8x32xf32>
    %c0_14 = arith.constant 0 : index
    %c0_15 = arith.constant 0 : index
    %c0_16 = arith.constant 0 : index
    %c0_17 = arith.constant 0 : index
    %16 = vector.load %arg7[%c0_14, %c0_15, %c0_16, %c0_17] : memref<1x1x8x32xf32, #tpu.memory_space<vmem>>, vector<1x1x8x32xf32>
    %17 = vector.shape_cast %16 : vector<1x1x8x32xf32> to vector<8x32xf32>
    %18 = vector.shape_cast %15 : vector<8x32xf32> to vector<1x1x8x32xf32>
    tpu.vector_store %arg7[%c0_14, %c0_15, %c0_16, %c0_17], %18 {strides = array<i32>} : memref<1x1x8x32xf32, #tpu.memory_space<vmem>>, vector<1x1x8x32xf32>,
    return
  }
  func.func @transform_0(%arg0: i32, %arg1: i32) -> (i32, i32, i32) {
    %c0_i32 = arith.constant 0 : i32
    %c0_i32_0 = arith.constant 0 : i32
    return %arg0, %arg1, %c0_i32 : i32, i32, i32
  }
  func.func @transform_1(%arg0: i32, %arg1: i32) -> (i32, i32) {
    %c0_i32 = arith.constant 0 : i32
    %c0_i32_0 = arith.constant 0 : i32
    %c0_i32_1 = arith.constant 0 : i32
    return %c0_i32, %c0_i32_0 : i32, i32
  }
  func.func @transform_2(%arg0: i32, %arg1: i32) -> (i32, i32) {
    %c0_i32 = arith.constant 0 : i32
    %c0_i32_0 = arith.constant 0 : i32
    %c0_i32_1 = arith.constant 0 : i32
    return %c0_i32, %c0_i32_0 : i32, i32
  }
  func.func @transform_3(%arg0: i32, %arg1: i32) -> (i32, i32, i32, i32) {
    %c0_i32 = arith.constant 0 : i32
    %c0_i32_0 = arith.constant 0 : i32
    %c0_i32_1 = arith.constant 0 : i32
    return %arg0, %c0_i32, %arg1, %c0_i32_0 : i32, i32, i32, i32
  }
  func.func @transform_4(%arg0: i32, %arg1: i32) -> (i32, i32, i32, i32) {
    %c0_i32 = arith.constant 0 : i32
    %c0_i32_0 = arith.constant 0 : i32
    %c0_i32_1 = arith.constant 0 : i32
    return %arg0, %c0_i32, %arg1, %c0_i32_0 : i32, i32, i32, i32
  }
  func.func @transform_5(%arg0: i32, %arg1: i32) -> (i32, i32, i32, i32) {
    %c0_i32 = arith.constant 0 : i32
    %c0_i32_0 = arith.constant 0 : i32
    %c0_i32_1 = arith.constant 0 : i32
    return %arg0, %c0_i32, %arg1, %c0_i32_0 : i32, i32, i32, i32
  }
}

module attributes {stable_mosaic.version = 11 : i64} {
  func.func @_flash_kernel(%arg0: i32, %arg1: i32, %arg2: i32, %arg3: i32, %arg4: memref<1x1x8x32xf32, #tpu.memory_space<vmem>>, %arg5: memref<1x1x8x32xf32, #tpu.memory_space<vmem>>, %arg6: memref<1x1x8x32xf32, #tpu.memory_space<vmem>>, %arg7: memref<1x8x32xf32, #tpu.memory_space<vmem>>, %arg8: memref<8x4xf32, #tpu.memory_space<vmem>>, %arg9: memref<8x4xf32, #tpu.memory_space<vmem>>, %arg10: memref<8x32xf32, #tpu.memory_space<vmem>>) attributes {dimension_semantics = [#tpu.dimension_semantics<parallel>, #tpu.dimension_semantics<parallel>, #tpu.dimension_semantics<parallel>, #tpu.dimension_semantics<arbitrary>], iteration_bounds = array<i64: 2, 1, 1, 1>, scalar_prefetch = 0 : i64, scratch_operands = 3 : i64, tpu.core_type = #tpu.core_type<tc>, window_params = [{transform_indices = @transform_0, window_bounds = array<i64: 1, 1, 8, 32>}, {transform_indices = @transform_1, window_bounds = array<i64: 1, 1, 8, 32>}, {transform_indices = @transform_2, window_bounds = array<i64: 1, 1, 8, 32>}, {transform_indices = @transform_3, window_bounds = array<i64: 1, 8, 32>}]} {
    %c0_i32 = arith.constant 0 : i32
    %0 = arith.cmpi eq, %arg3, %c0_i32 : i32
    %1 = arith.extui %0 : i1 to i32
    %c0_i32_0 = arith.constant 0 : i32
    %2 = arith.cmpi ne, %1, %c0_i32_0 : i32
    scf.if %2 {
      %cst_71 = arith.constant 0xFF800000 : f32
      %116 = vector.broadcast %cst_71 : f32 to vector<8x4xf32>
      %c0_72 = arith.constant 0 : index
      %c0_73 = arith.constant 0 : index
      %117 = vector.load %arg8[%c0_72, %c0_73] : memref<8x4xf32, #tpu.memory_space<vmem>>, vector<8x4xf32>
      tpu.vector_store %arg8[%c0_72, %c0_73], %116 {strides = array<i32>} : memref<8x4xf32, #tpu.memory_space<vmem>>, vector<8x4xf32>,
      %cst_74 = arith.constant 0.000000e+00 : f32
      %118 = vector.broadcast %cst_74 : f32 to vector<8x4xf32>
      %c0_75 = arith.constant 0 : index
      %c0_76 = arith.constant 0 : index
      %119 = vector.load %arg9[%c0_75, %c0_76] : memref<8x4xf32, #tpu.memory_space<vmem>>, vector<8x4xf32>
      tpu.vector_store %arg9[%c0_75, %c0_76], %118 {strides = array<i32>} : memref<8x4xf32, #tpu.memory_space<vmem>>, vector<8x4xf32>,
      %cst_77 = arith.constant 0.000000e+00 : f32
      %120 = vector.broadcast %cst_77 : f32 to vector<8x32xf32>
      %c0_78 = arith.constant 0 : index
      %c0_79 = arith.constant 0 : index
      %121 = vector.load %arg10[%c0_78, %c0_79] : memref<8x32xf32, #tpu.memory_space<vmem>>, vector<8x32xf32>
      tpu.vector_store %arg10[%c0_78, %c0_79], %120 {strides = array<i32>} : memref<8x32xf32, #tpu.memory_space<vmem>>, vector<8x32xf32>,
    } else {
    }
    %c0 = arith.constant 0 : index
    %c0_1 = arith.constant 0 : index
    %c0_2 = arith.constant 0 : index
    %c0_3 = arith.constant 0 : index
    %3 = vector.load %arg4[%c0, %c0_1, %c0_2, %c0_3] : memref<1x1x8x32xf32, #tpu.memory_space<vmem>>, vector<1x1x8x32xf32>
    %4 = vector.shape_cast %3 : vector<1x1x8x32xf32> to vector<8x32xf32>
    %c0_4 = arith.constant 0 : index
    %c0_5 = arith.constant 0 : index
    %c0_6 = arith.constant 0 : index
    %c0_7 = arith.constant 0 : index
    %5 = vector.load %arg5[%c0_4, %c0_5, %c0_6, %c0_7] : memref<1x1x8x32xf32, #tpu.memory_space<vmem>>, vector<1x1x8x32xf32>
    %6 = vector.shape_cast %5 : vector<1x1x8x32xf32> to vector<8x32xf32>
    %c0_8 = arith.constant 0 : index
    %c0_9 = arith.constant 0 : index
    %c0_10 = arith.constant 0 : index
    %c0_11 = arith.constant 0 : index
    %7 = vector.load %arg6[%c0_8, %c0_9, %c0_10, %c0_11] : memref<1x1x8x32xf32, #tpu.memory_space<vmem>>, vector<1x1x8x32xf32>
    %8 = vector.shape_cast %7 : vector<1x1x8x32xf32> to vector<8x32xf32>
    %9 = vector.extract_strided_slice %4 {offsets = [0, 0], sizes = [8, 8], strides = [1, 1]} : vector<8x32xf32> to vector<8x8xf32>
    %10 = vector.extract_strided_slice %6 {offsets = [0, 0], sizes = [8, 8], strides = [1, 1]} : vector<8x32xf32> to vector<8x8xf32>
    %11 = vector.extract_strided_slice %8 {offsets = [0, 0], sizes = [8, 8], strides = [1, 1]} : vector<8x32xf32> to vector<8x8xf32>
    %cst = arith.constant dense<0.000000e+00> : vector<8x8xf32>
    %12 = tpu.matmul %9, %10, %cst {dimension_numbers = #tpu.dot_dimension_numbers<[1], [1], [0], [0], [0, 0, 1, 0], [], []>} : vector<8x8xf32>, vector<8x8xf32>, vector<8x8xf32> -> vector<8x8xf32>
    %c0_12 = arith.constant 0 : index
    %c0_13 = arith.constant 0 : index
    %13 = vector.load %arg8[%c0_12, %c0_13] : memref<8x4xf32, #tpu.memory_space<vmem>>, vector<8x1xf32>
    %cst_14 = arith.constant dense<0xFF800000> : vector<8xf32>
    %14 = vector.multi_reduction <maximumf>, %12, %cst_14 [1] : vector<8x8xf32> to vector<8xf32>
    %15 = vector.shape_cast %14 : vector<8xf32> to vector<8x1xf32>
    %16 = arith.maximumf %13, %15 : vector<8x1xf32>
    %17 = arith.subf %13, %16 : vector<8x1xf32>
    %18 = math.exp %17 : vector<8x1xf32>
    %19 = vector.broadcast %16 : vector<8x1xf32> to vector<8x8xf32>
    %20 = arith.subf %12, %19 : vector<8x8xf32>
    %21 = math.exp %20 : vector<8x8xf32>
    %c0_15 = arith.constant 0 : index
    %c0_16 = arith.constant 0 : index
    %22 = vector.load %arg9[%c0_15, %c0_16] : memref<8x4xf32, #tpu.memory_space<vmem>>, vector<8x1xf32>
    %23 = arith.mulf %18, %22 : vector<8x1xf32>
    %cst_17 = arith.constant dense<0.000000e+00> : vector<8xf32>
    %24 = vector.multi_reduction <add>, %21, %cst_17 [1] : vector<8x8xf32> to vector<8xf32>
    %25 = vector.shape_cast %24 : vector<8xf32> to vector<8x1xf32>
    %26 = arith.addf %23, %25 : vector<8x1xf32>
    %c0_18 = arith.constant 0 : index
    %c0_19 = arith.constant 0 : index
    %27 = vector.load %arg9[%c0_18, %c0_19] : memref<8x4xf32, #tpu.memory_space<vmem>>, vector<8x1xf32>
    tpu.vector_store %arg9[%c0_18, %c0_19], %26 {strides = array<i32>} : memref<8x4xf32, #tpu.memory_space<vmem>>, vector<8x1xf32>,
    %c0_20 = arith.constant 0 : index
    %c0_21 = arith.constant 0 : index
    %28 = vector.load %arg10[%c0_20, %c0_21] : memref<8x32xf32, #tpu.memory_space<vmem>>, vector<8x8xf32>
    %29 = vector.broadcast %18 : vector<8x1xf32> to vector<8x8xf32>
    %30 = arith.mulf %29, %28 : vector<8x8xf32>
    %cst_22 = arith.constant dense<0.000000e+00> : vector<8x8xf32>
    %31 = tpu.matmul %21, %11, %cst_22 {dimension_numbers = #tpu.dot_dimension_numbers<[1], [0], [0], [1], [0, 0, 1, 1], [], []>} : vector<8x8xf32>, vector<8x8xf32>, vector<8x8xf32> -> vector<8x8xf32>
    %32 = arith.addf %30, %31 : vector<8x8xf32>
    %c0_23 = arith.constant 0 : index
    %c0_24 = arith.constant 0 : index
    %33 = vector.load %arg10[%c0_23, %c0_24] : memref<8x32xf32, #tpu.memory_space<vmem>>, vector<8x8xf32>
    tpu.vector_store %arg10[%c0_23, %c0_24], %32 {strides = array<i32>} : memref<8x32xf32, #tpu.memory_space<vmem>>, vector<8x8xf32>,
    %c0_25 = arith.constant 0 : index
    %c0_26 = arith.constant 0 : index
    %34 = vector.load %arg8[%c0_25, %c0_26] : memref<8x4xf32, #tpu.memory_space<vmem>>, vector<8x1xf32>
    tpu.vector_store %arg8[%c0_25, %c0_26], %16 {strides = array<i32>} : memref<8x4xf32, #tpu.memory_space<vmem>>, vector<8x1xf32>,
    %35 = vector.extract_strided_slice %4 {offsets = [0, 8], sizes = [8, 8], strides = [1, 1]} : vector<8x32xf32> to vector<8x8xf32>
    %36 = vector.extract_strided_slice %6 {offsets = [0, 8], sizes = [8, 8], strides = [1, 1]} : vector<8x32xf32> to vector<8x8xf32>
    %37 = vector.extract_strided_slice %8 {offsets = [0, 8], sizes = [8, 8], strides = [1, 1]} : vector<8x32xf32> to vector<8x8xf32>
    %cst_27 = arith.constant dense<0.000000e+00> : vector<8x8xf32>
    %38 = tpu.matmul %35, %36, %cst_27 {dimension_numbers = #tpu.dot_dimension_numbers<[1], [1], [0], [0], [0, 0, 1, 0], [], []>} : vector<8x8xf32>, vector<8x8xf32>, vector<8x8xf32> -> vector<8x8xf32>
    %c0_28 = arith.constant 0 : index
    %c1 = arith.constant 1 : index
    %39 = vector.load %arg8[%c0_28, %c1] : memref<8x4xf32, #tpu.memory_space<vmem>>, vector<8x1xf32>
    %cst_29 = arith.constant dense<0xFF800000> : vector<8xf32>
    %40 = vector.multi_reduction <maximumf>, %38, %cst_29 [1] : vector<8x8xf32> to vector<8xf32>
    %41 = vector.shape_cast %40 : vector<8xf32> to vector<8x1xf32>
    %42 = arith.maximumf %39, %41 : vector<8x1xf32>
    %43 = arith.subf %39, %42 : vector<8x1xf32>
    %44 = math.exp %43 : vector<8x1xf32>
    %45 = vector.broadcast %42 : vector<8x1xf32> to vector<8x8xf32>
    %46 = arith.subf %38, %45 : vector<8x8xf32>
    %47 = math.exp %46 : vector<8x8xf32>
    %c0_30 = arith.constant 0 : index
    %c1_31 = arith.constant 1 : index
    %48 = vector.load %arg9[%c0_30, %c1_31] : memref<8x4xf32, #tpu.memory_space<vmem>>, vector<8x1xf32>
    %49 = arith.mulf %44, %48 : vector<8x1xf32>
    %cst_32 = arith.constant dense<0.000000e+00> : vector<8xf32>
    %50 = vector.multi_reduction <add>, %47, %cst_32 [1] : vector<8x8xf32> to vector<8xf32>
    %51 = vector.shape_cast %50 : vector<8xf32> to vector<8x1xf32>
    %52 = arith.addf %49, %51 : vector<8x1xf32>
    %c0_33 = arith.constant 0 : index
    %c1_34 = arith.constant 1 : index
    %53 = vector.load %arg9[%c0_33, %c1_34] : memref<8x4xf32, #tpu.memory_space<vmem>>, vector<8x1xf32>
    tpu.vector_store %arg9[%c0_33, %c1_34], %52 {strides = array<i32>} : memref<8x4xf32, #tpu.memory_space<vmem>>, vector<8x1xf32>,
    %c0_35 = arith.constant 0 : index
    %c8 = arith.constant 8 : index
    %54 = vector.load %arg10[%c0_35, %c8] : memref<8x32xf32, #tpu.memory_space<vmem>>, vector<8x8xf32>
    %55 = vector.broadcast %44 : vector<8x1xf32> to vector<8x8xf32>
    %56 = arith.mulf %55, %54 : vector<8x8xf32>
    %cst_36 = arith.constant dense<0.000000e+00> : vector<8x8xf32>
    %57 = tpu.matmul %47, %37, %cst_36 {dimension_numbers = #tpu.dot_dimension_numbers<[1], [0], [0], [1], [0, 0, 1, 1], [], []>} : vector<8x8xf32>, vector<8x8xf32>, vector<8x8xf32> -> vector<8x8xf32>
    %58 = arith.addf %56, %57 : vector<8x8xf32>
    %c0_37 = arith.constant 0 : index
    %c8_38 = arith.constant 8 : index
    %59 = vector.load %arg10[%c0_37, %c8_38] : memref<8x32xf32, #tpu.memory_space<vmem>>, vector<8x8xf32>
    tpu.vector_store %arg10[%c0_37, %c8_38], %58 {strides = array<i32>} : memref<8x32xf32, #tpu.memory_space<vmem>>, vector<8x8xf32>,
    %c0_39 = arith.constant 0 : index
    %c1_40 = arith.constant 1 : index
    %60 = vector.load %arg8[%c0_39, %c1_40] : memref<8x4xf32, #tpu.memory_space<vmem>>, vector<8x1xf32>
    tpu.vector_store %arg8[%c0_39, %c1_40], %42 {strides = array<i32>} : memref<8x4xf32, #tpu.memory_space<vmem>>, vector<8x1xf32>,
    %61 = vector.extract_strided_slice %4 {offsets = [0, 16], sizes = [8, 8], strides = [1, 1]} : vector<8x32xf32> to vector<8x8xf32>
    %62 = vector.extract_strided_slice %6 {offsets = [0, 16], sizes = [8, 8], strides = [1, 1]} : vector<8x32xf32> to vector<8x8xf32>
    %63 = vector.extract_strided_slice %8 {offsets = [0, 16], sizes = [8, 8], strides = [1, 1]} : vector<8x32xf32> to vector<8x8xf32>
    %cst_41 = arith.constant dense<0.000000e+00> : vector<8x8xf32>
    %64 = tpu.matmul %61, %62, %cst_41 {dimension_numbers = #tpu.dot_dimension_numbers<[1], [1], [0], [0], [0, 0, 1, 0], [], []>} : vector<8x8xf32>, vector<8x8xf32>, vector<8x8xf32> -> vector<8x8xf32>
    %c0_42 = arith.constant 0 : index
    %c2 = arith.constant 2 : index
    %65 = vector.load %arg8[%c0_42, %c2] : memref<8x4xf32, #tpu.memory_space<vmem>>, vector<8x1xf32>
    %cst_43 = arith.constant dense<0xFF800000> : vector<8xf32>
    %66 = vector.multi_reduction <maximumf>, %64, %cst_43 [1] : vector<8x8xf32> to vector<8xf32>
    %67 = vector.shape_cast %66 : vector<8xf32> to vector<8x1xf32>
    %68 = arith.maximumf %65, %67 : vector<8x1xf32>
    %69 = arith.subf %65, %68 : vector<8x1xf32>
    %70 = math.exp %69 : vector<8x1xf32>
    %71 = vector.broadcast %68 : vector<8x1xf32> to vector<8x8xf32>
    %72 = arith.subf %64, %71 : vector<8x8xf32>
    %73 = math.exp %72 : vector<8x8xf32>
    %c0_44 = arith.constant 0 : index
    %c2_45 = arith.constant 2 : index
    %74 = vector.load %arg9[%c0_44, %c2_45] : memref<8x4xf32, #tpu.memory_space<vmem>>, vector<8x1xf32>
    %75 = arith.mulf %70, %74 : vector<8x1xf32>
    %cst_46 = arith.constant dense<0.000000e+00> : vector<8xf32>
    %76 = vector.multi_reduction <add>, %73, %cst_46 [1] : vector<8x8xf32> to vector<8xf32>
    %77 = vector.shape_cast %76 : vector<8xf32> to vector<8x1xf32>
    %78 = arith.addf %75, %77 : vector<8x1xf32>
    %c0_47 = arith.constant 0 : index
    %c2_48 = arith.constant 2 : index
    %79 = vector.load %arg9[%c0_47, %c2_48] : memref<8x4xf32, #tpu.memory_space<vmem>>, vector<8x1xf32>
    tpu.vector_store %arg9[%c0_47, %c2_48], %78 {strides = array<i32>} : memref<8x4xf32, #tpu.memory_space<vmem>>, vector<8x1xf32>,
    %c0_49 = arith.constant 0 : index
    %c16 = arith.constant 16 : index
    %80 = vector.load %arg10[%c0_49, %c16] : memref<8x32xf32, #tpu.memory_space<vmem>>, vector<8x8xf32>
    %81 = vector.broadcast %70 : vector<8x1xf32> to vector<8x8xf32>
    %82 = arith.mulf %81, %80 : vector<8x8xf32>
    %cst_50 = arith.constant dense<0.000000e+00> : vector<8x8xf32>
    %83 = tpu.matmul %73, %63, %cst_50 {dimension_numbers = #tpu.dot_dimension_numbers<[1], [0], [0], [1], [0, 0, 1, 1], [], []>} : vector<8x8xf32>, vector<8x8xf32>, vector<8x8xf32> -> vector<8x8xf32>
    %84 = arith.addf %82, %83 : vector<8x8xf32>
    %c0_51 = arith.constant 0 : index
    %c16_52 = arith.constant 16 : index
    %85 = vector.load %arg10[%c0_51, %c16_52] : memref<8x32xf32, #tpu.memory_space<vmem>>, vector<8x8xf32>
    tpu.vector_store %arg10[%c0_51, %c16_52], %84 {strides = array<i32>} : memref<8x32xf32, #tpu.memory_space<vmem>>, vector<8x8xf32>,
    %c0_53 = arith.constant 0 : index
    %c2_54 = arith.constant 2 : index
    %86 = vector.load %arg8[%c0_53, %c2_54] : memref<8x4xf32, #tpu.memory_space<vmem>>, vector<8x1xf32>
    tpu.vector_store %arg8[%c0_53, %c2_54], %68 {strides = array<i32>} : memref<8x4xf32, #tpu.memory_space<vmem>>, vector<8x1xf32>,
    %87 = vector.extract_strided_slice %4 {offsets = [0, 24], sizes = [8, 8], strides = [1, 1]} : vector<8x32xf32> to vector<8x8xf32>
    %88 = vector.extract_strided_slice %6 {offsets = [0, 24], sizes = [8, 8], strides = [1, 1]} : vector<8x32xf32> to vector<8x8xf32>
    %89 = vector.extract_strided_slice %8 {offsets = [0, 24], sizes = [8, 8], strides = [1, 1]} : vector<8x32xf32> to vector<8x8xf32>
    %cst_55 = arith.constant dense<0.000000e+00> : vector<8x8xf32>
    %90 = tpu.matmul %87, %88, %cst_55 {dimension_numbers = #tpu.dot_dimension_numbers<[1], [1], [0], [0], [0, 0, 1, 0], [], []>} : vector<8x8xf32>, vector<8x8xf32>, vector<8x8xf32> -> vector<8x8xf32>
    %c0_56 = arith.constant 0 : index
    %c3 = arith.constant 3 : index
    %91 = vector.load %arg8[%c0_56, %c3] : memref<8x4xf32, #tpu.memory_space<vmem>>, vector<8x1xf32>
    %cst_57 = arith.constant dense<0xFF800000> : vector<8xf32>
    %92 = vector.multi_reduction <maximumf>, %90, %cst_57 [1] : vector<8x8xf32> to vector<8xf32>
    %93 = vector.shape_cast %92 : vector<8xf32> to vector<8x1xf32>
    %94 = arith.maximumf %91, %93 : vector<8x1xf32>
    %95 = arith.subf %91, %94 : vector<8x1xf32>
    %96 = math.exp %95 : vector<8x1xf32>
    %97 = vector.broadcast %94 : vector<8x1xf32> to vector<8x8xf32>
    %98 = arith.subf %90, %97 : vector<8x8xf32>
    %99 = math.exp %98 : vector<8x8xf32>
    %c0_58 = arith.constant 0 : index
    %c3_59 = arith.constant 3 : index
    %100 = vector.load %arg9[%c0_58, %c3_59] : memref<8x4xf32, #tpu.memory_space<vmem>>, vector<8x1xf32>
    %101 = arith.mulf %96, %100 : vector<8x1xf32>
    %cst_60 = arith.constant dense<0.000000e+00> : vector<8xf32>
    %102 = vector.multi_reduction <add>, %99, %cst_60 [1] : vector<8x8xf32> to vector<8xf32>
    %103 = vector.shape_cast %102 : vector<8xf32> to vector<8x1xf32>
    %104 = arith.addf %101, %103 : vector<8x1xf32>
    %c0_61 = arith.constant 0 : index
    %c3_62 = arith.constant 3 : index
    %105 = vector.load %arg9[%c0_61, %c3_62] : memref<8x4xf32, #tpu.memory_space<vmem>>, vector<8x1xf32>
    tpu.vector_store %arg9[%c0_61, %c3_62], %104 {strides = array<i32>} : memref<8x4xf32, #tpu.memory_space<vmem>>, vector<8x1xf32>,
    %c0_63 = arith.constant 0 : index
    %c24 = arith.constant 24 : index
    %106 = vector.load %arg10[%c0_63, %c24] : memref<8x32xf32, #tpu.memory_space<vmem>>, vector<8x8xf32>
    %107 = vector.broadcast %96 : vector<8x1xf32> to vector<8x8xf32>
    %108 = arith.mulf %107, %106 : vector<8x8xf32>
    %cst_64 = arith.constant dense<0.000000e+00> : vector<8x8xf32>
    %109 = tpu.matmul %99, %89, %cst_64 {dimension_numbers = #tpu.dot_dimension_numbers<[1], [0], [0], [1], [0, 0, 1, 1], [], []>} : vector<8x8xf32>, vector<8x8xf32>, vector<8x8xf32> -> vector<8x8xf32>
    %110 = arith.addf %108, %109 : vector<8x8xf32>
    %c0_65 = arith.constant 0 : index
    %c24_66 = arith.constant 24 : index
    %111 = vector.load %arg10[%c0_65, %c24_66] : memref<8x32xf32, #tpu.memory_space<vmem>>, vector<8x8xf32>
    tpu.vector_store %arg10[%c0_65, %c24_66], %110 {strides = array<i32>} : memref<8x32xf32, #tpu.memory_space<vmem>>, vector<8x8xf32>,
    %c0_67 = arith.constant 0 : index
    %c3_68 = arith.constant 3 : index
    %112 = vector.load %arg8[%c0_67, %c3_68] : memref<8x4xf32, #tpu.memory_space<vmem>>, vector<8x1xf32>
    tpu.vector_store %arg8[%c0_67, %c3_68], %94 {strides = array<i32>} : memref<8x4xf32, #tpu.memory_space<vmem>>, vector<8x1xf32>,
    %c0_i32_69 = arith.constant 0 : i32
    %113 = arith.cmpi eq, %arg3, %c0_i32_69 : i32
    %114 = arith.extui %113 : i1 to i32
    %c0_i32_70 = arith.constant 0 : i32
    %115 = arith.cmpi ne, %114, %c0_i32_70 : i32
    scf.if %115 {
      %c0_71 = arith.constant 0 : index
      %c0_72 = arith.constant 0 : index
      %116 = vector.load %arg10[%c0_71, %c0_72] : memref<8x32xf32, #tpu.memory_space<vmem>>, vector<8x8xf32>
      %c0_73 = arith.constant 0 : index
      %c0_74 = arith.constant 0 : index
      %117 = vector.load %arg9[%c0_73, %c0_74] : memref<8x4xf32, #tpu.memory_space<vmem>>, vector<8x1xf32>
      %118 = vector.broadcast %117 : vector<8x1xf32> to vector<8x8xf32>
      %119 = arith.divf %116, %118 : vector<8x8xf32>
      %c0_75 = arith.constant 0 : index
      %c8_76 = arith.constant 8 : index
      %120 = vector.load %arg10[%c0_75, %c8_76] : memref<8x32xf32, #tpu.memory_space<vmem>>, vector<8x8xf32>
      %c0_77 = arith.constant 0 : index
      %c1_78 = arith.constant 1 : index
      %121 = vector.load %arg9[%c0_77, %c1_78] : memref<8x4xf32, #tpu.memory_space<vmem>>, vector<8x1xf32>
      %122 = vector.broadcast %121 : vector<8x1xf32> to vector<8x8xf32>
      %123 = arith.divf %120, %122 : vector<8x8xf32>
      %c0_79 = arith.constant 0 : index
      %c16_80 = arith.constant 16 : index
      %124 = vector.load %arg10[%c0_79, %c16_80] : memref<8x32xf32, #tpu.memory_space<vmem>>, vector<8x8xf32>
      %c0_81 = arith.constant 0 : index
      %c2_82 = arith.constant 2 : index
      %125 = vector.load %arg9[%c0_81, %c2_82] : memref<8x4xf32, #tpu.memory_space<vmem>>, vector<8x1xf32>
      %126 = vector.broadcast %125 : vector<8x1xf32> to vector<8x8xf32>
      %127 = arith.divf %124, %126 : vector<8x8xf32>
      %c0_83 = arith.constant 0 : index
      %c24_84 = arith.constant 24 : index
      %128 = vector.load %arg10[%c0_83, %c24_84] : memref<8x32xf32, #tpu.memory_space<vmem>>, vector<8x8xf32>
      %c0_85 = arith.constant 0 : index
      %c3_86 = arith.constant 3 : index
      %129 = vector.load %arg9[%c0_85, %c3_86] : memref<8x4xf32, #tpu.memory_space<vmem>>, vector<8x1xf32>
      %130 = vector.broadcast %129 : vector<8x1xf32> to vector<8x8xf32>
      %131 = arith.divf %128, %130 : vector<8x8xf32>
      %132 = tpu.concatenate %119, %123, %127, %131 in 1 : vector<8x8xf32>, vector<8x8xf32>, vector<8x8xf32>, vector<8x8xf32> -> vector<8x32xf32>
      %c0_87 = arith.constant 0 : index
      %c0_88 = arith.constant 0 : index
      %c0_89 = arith.constant 0 : index
      %133 = vector.load %arg7[%c0_87, %c0_88, %c0_89] : memref<1x8x32xf32, #tpu.memory_space<vmem>>, vector<1x8x32xf32>
      %134 = vector.shape_cast %133 : vector<1x8x32xf32> to vector<8x32xf32>
      %135 = vector.shape_cast %132 : vector<8x32xf32> to vector<1x8x32xf32>
      tpu.vector_store %arg7[%c0_87, %c0_88, %c0_89], %135 {strides = array<i32>} : memref<1x8x32xf32, #tpu.memory_space<vmem>>, vector<1x8x32xf32>,
    } else {
    }
    return
  }
  func.func @transform_0(%arg0: i32, %arg1: i32, %arg2: i32, %arg3: i32) -> (i32, i32, i32, i32) {
    %c0_i32 = arith.constant 0 : i32
    %c0_i32_0 = arith.constant 0 : i32
    return %arg0, %arg1, %arg2, %c0_i32 : i32, i32, i32, i32
  }
  func.func @transform_1(%arg0: i32, %arg1: i32, %arg2: i32, %arg3: i32) -> (i32, i32, i32, i32) {
    %c0_i32 = arith.constant 0 : i32
    %c0_i32_0 = arith.constant 0 : i32
    return %arg0, %arg1, %arg3, %c0_i32 : i32, i32, i32, i32
  }
  func.func @transform_2(%arg0: i32, %arg1: i32, %arg2: i32, %arg3: i32) -> (i32, i32, i32, i32) {
    %c0_i32 = arith.constant 0 : i32
    %c0_i32_0 = arith.constant 0 : i32
    return %arg0, %arg1, %arg3, %c0_i32 : i32, i32, i32, i32
  }
  func.func @transform_3(%arg0: i32, %arg1: i32, %arg2: i32, %arg3: i32) -> (i32, i32, i32) {
    %c0_i32 = arith.constant 0 : i32
    return %arg0, %arg2, %arg1 : i32, i32, i32
  }
}

</mosaic_0001>

<llo_original>
// kernel: vivit_attention.3
$region0: #{vivit_attention.3}
  #allocation0 [shape = 'u32[]', space=smem, size = 0x4, offset = 0x4, fixed_abs, tag = 'smem constant byte address 0x4 - core index']
  #allocation1 [shape = 'u32[144,128]{1,0:T(1,128)}', space=vmem, size = 0x12000, scoped, tag = 'internal scratch']
  %s0 = inlined_call_operand.hbm [shape: f32[2,8,32], index: 0, kind: input, shape index: {}]
  %s1 = inlined_call_operand.hbm [shape: f32[32,96], index: 1, kind: input, shape index: {}]
  %s2 = inlined_call_operand.vmem [shape: f32[1,96], index: 2, kind: input, shape index: {}]
  %s3 = inlined_call_operand.vmem [shape: f32[2,1,8,32], index: 3, kind: output, shape index: {0}]
  %s4 = inlined_call_operand.vmem [shape: f32[2,1,8,32], index: 4, kind: output, shape index: {1}]
  %s5 = inlined_call_operand.vmem [shape: f32[2,1,8,32], index: 5, kind: output, shape index: {2}]
  %6 = xla_tuple %s3, %s4, %s5
  %s7 = sld [smem:[#allocation0]]
  $region69: #{vivit_attention.3} parent=0
    _
  %s9 = ssub.s32 1, %s7
  %s10 = scalar_select 0, %s9, %s7
  $region1: #{vivit_attention.3} parent=0
    #allocation2 [shape = 'u8[8192]{0}', space=vmem, size = 0x2000, scoped, tag = 'input window, operand 0']
    #allocation3 [shape = 's32[2]{0}', space=sflag, size = 0x8, scoped, tag = 'scoped memory for vivit_attention.3']
    #allocation4 [shape = 'u8[16384]{0}', space=vmem, size = 0x4000, scoped, tag = 'input window, operand 1, single buffered']
    #allocation5 [shape = 's32[1]{0}', space=sflag, size = 0x4, scoped, tag = 'scoped memory for vivit_attention.3']
    %11 = vsyncpa [#allocation3], 0
    %s12 = scalar_lea.sflag [#allocation3], 1
    %13 = vsyncpa %s12, 0
    %14 = vsyncpa [#allocation5], 0
    loop: start=0, step=1, limit=4
    $region2: #{vivit_attention.3} parent=1 // loop_pre_header
      _
    $region3: #{vivit_attention.3} parent=1 // loop_header
      %s16 = sphi 0, %s20
      %p17 = scmp.ge.s32.totalorder %s16, 4
      %s23 = sphi 0, %s35
      %s24 = sphi 0, %s31
      %s25 = sphi 0, %s23
      %s26 = sphi 0, %s24
      %s27 = sphi 0, %s25
      %s28 = sphi 0, %s26
      %s40 = sphi 0, %s42
      %s43 = sphi 0, %s40
      %s44 = sphi 0, %s43
      %s60 = sphi 0, %s44
      %s64 = sphi 0, %s64
      %s66 = sphi 0, %s64
      %s67 = sphi 0, %s66
      %s81 = sphi 0, %s67
      %s85 = sphi 0, %s85
      %s87 = sphi 0, %s85
      %s88 = sphi 0, %s87
      %s102 = sphi 0, %s88
      %s110 = sphi 0, %s112
      %s113 = sphi 0, %s110
      %s114 = sphi 0, %s113
      %s130 = sphi 0, %s114
      %s138 = sphi 0, %s140
      %s141 = sphi 0, %s138
      %s142 = sphi 0, %s141
      %s158 = sphi 0, %s142
      %s166 = sphi 0, %s168
      %s169 = sphi 0, %s166
      %s170 = sphi 0, %s169
      %s186 = sphi 0, %s170
    $region4: #{vivit_attention.3} parent=1 // loop_header_branch
      %19 = sbr.rel (%p17) target = $region8
    $region5: #{vivit_attention.3} parent=1 // loop_body
      %s21 = ssub.s32 %s16, 1
      %s22 = ssub.s32 %s16, 2
      %s29 = sadd.s32 1, %s24
      %p30 = scmp.ge.s32.totalorder %s29, 1
      %s31 = scalar_select %p30, 0, %s29
      %s32 = sadd.s32 1, %s23
      %s33 = scalar_select %p30, %s32, %s23
      %p34 = scmp.ge.s32.totalorder %s33, 2
      %s35 = scalar_select %p34, 0, %s33
      %s36 = ssub.s32 %s23, %s35
      %s37 = ssub.s32 %s24, %s31
      %s38 = sor.u32 %s36, %s37
      %p39 = scmp.eq.s32.totalorder %s38, 0
      %s41 = sadd.s32 %s40, 1
      %s42 = scalar_select %p39, %s40, %s41
      %p45 = pneg %p39
      %p46 = scmp.eq.s32.totalorder %s16, 1
      %p47 = por %p45, %p46
      %p48 = scmp.ne.s32.totalorder %s40, %s43
      %p49 = scmp.eq.s32.totalorder %s16, 0
      %p50 = por %p48, %p49
      %p51 = scmp.ne.s32.totalorder %s40, %s43
      %p52 = scmp.eq.s32.totalorder %s21, 1
      %p53 = por %p51, %p52
      %p54 = scmp.ne.s32.totalorder %s43, %s44
      %p55 = scmp.eq.s32.totalorder %s21, 0
      %p56 = por %p54, %p55
      %p57 = scmp.ne.s32.totalorder %s43, %s44
      %p58 = scmp.eq.s32.totalorder %s22, 1
      %p59 = por %p57, %p58
      %p61 = scmp.ne.s32.totalorder %s44, %s60
      %p62 = scmp.eq.s32.totalorder %s22, 0
      %p63 = por %p61, %p62
      %s65 = sadd.s32 %s64, 1
      %p68 = scmp.eq.s32.totalorder %s16, 1
      %p69 = scmp.ne.s32.totalorder %s64, %s66
      %p70 = scmp.eq.s32.totalorder %s16, 0
      %p71 = por %p69, %p70
      %p72 = scmp.ne.s32.totalorder %s64, %s66
      %p73 = scmp.eq.s32.totalorder %s21, 1
      %p74 = por %p72, %p73
      %p75 = scmp.ne.s32.totalorder %s66, %s67
      %p76 = scmp.eq.s32.totalorder %s21, 0
      %p77 = por %p75, %p76
      %p78 = scmp.ne.s32.totalorder %s66, %s67
      %p79 = scmp.eq.s32.totalorder %s22, 1
      %p80 = por %p78, %p79
      %p82 = scmp.ne.s32.totalorder %s67, %s81
      %p83 = scmp.eq.s32.totalorder %s22, 0
      %p84 = por %p82, %p83
      %s86 = sadd.s32 %s85, 1
      %p89 = scmp.eq.s32.totalorder %s16, 1
      %p90 = scmp.ne.s32.totalorder %s85, %s87
      %p91 = scmp.eq.s32.totalorder %s16, 0
      %p92 = por %p90, %p91
      %p93 = scmp.ne.s32.totalorder %s85, %s87
      %p94 = scmp.eq.s32.totalorder %s21, 1
      %p95 = por %p93, %p94
      %p96 = scmp.ne.s32.totalorder %s87, %s88
      %p97 = scmp.eq.s32.totalorder %s21, 0
      %p98 = por %p96, %p97
      %p99 = scmp.ne.s32.totalorder %s87, %s88
      %p100 = scmp.eq.s32.totalorder %s22, 1
      %p101 = por %p99, %p100
      %p103 = scmp.ne.s32.totalorder %s88, %s102
      %p104 = scmp.eq.s32.totalorder %s22, 0
      %p105 = por %p103, %p104
      %s106 = ssub.s32 %s23, %s35
      %s107 = ssub.s32 %s24, %s31
      %s108 = sor.u32 %s106, %s107
      %p109 = scmp.eq.s32.totalorder %s108, 0
      %s111 = sadd.s32 %s110, 1
      %s112 = scalar_select %p109, %s110, %s111
      %p115 = pneg %p109
      %p116 = scmp.eq.s32.totalorder %s16, 1
      %p117 = por %p115, %p116
      %p118 = scmp.ne.s32.totalorder %s110, %s113
      %p119 = scmp.eq.s32.totalorder %s16, 0
      %p120 = por %p118, %p119
      %p121 = scmp.ne.s32.totalorder %s110, %s113
      %p122 = scmp.eq.s32.totalorder %s21, 1
      %p123 = por %p121, %p122
      %p124 = scmp.ne.s32.totalorder %s113, %s114
      %p125 = scmp.eq.s32.totalorder %s21, 0
      %p126 = por %p124, %p125
      %p127 = scmp.ne.s32.totalorder %s113, %s114
      %p128 = scmp.eq.s32.totalorder %s22, 1
      %p129 = por %p127, %p128
      %p131 = scmp.ne.s32.totalorder %s114, %s130
      %p132 = scmp.eq.s32.totalorder %s22, 0
      %p133 = por %p131, %p132
      %s134 = ssub.s32 %s23, %s35
      %s135 = ssub.s32 %s24, %s31
      %s136 = sor.u32 %s134, %s135
      %p137 = scmp.eq.s32.totalorder %s136, 0
      %s139 = sadd.s32 %s138, 1
      %s140 = scalar_select %p137, %s138, %s139
      %p143 = pneg %p137
      %p144 = scmp.eq.s32.totalorder %s16, 1
      %p145 = por %p143, %p144
      %p146 = scmp.ne.s32.totalorder %s138, %s141
      %p147 = scmp.eq.s32.totalorder %s16, 0
      %p148 = por %p146, %p147
      %p149 = scmp.ne.s32.totalorder %s138, %s141
      %p150 = scmp.eq.s32.totalorder %s21, 1
      %p151 = por %p149, %p150
      %p152 = scmp.ne.s32.totalorder %s141, %s142
      %p153 = scmp.eq.s32.totalorder %s21, 0
      %p154 = por %p152, %p153
      %p155 = scmp.ne.s32.totalorder %s141, %s142
      %p156 = scmp.eq.s32.totalorder %s22, 1
      %p157 = por %p155, %p156
      %p159 = scmp.ne.s32.totalorder %s142, %s158
      %p160 = scmp.eq.s32.totalorder %s22, 0
      %p161 = por %p159, %p160
      %s162 = ssub.s32 %s23, %s35
      %s163 = ssub.s32 %s24, %s31
      %s164 = sor.u32 %s162, %s163
      %p165 = scmp.eq.s32.totalorder %s164, 0
      %s167 = sadd.s32 %s166, 1
      %s168 = scalar_select %p165, %s166, %s167
      %p171 = pneg %p165
      %p172 = scmp.eq.s32.totalorder %s16, 1
      %p173 = por %p171, %p172
      %p174 = scmp.ne.s32.totalorder %s166, %s169
      %p175 = scmp.eq.s32.totalorder %s16, 0
      %p176 = por %p174, %p175
      %p177 = scmp.ne.s32.totalorder %s166, %s169
      %p178 = scmp.eq.s32.totalorder %s21, 1
      %p179 = por %p177, %p178
      %p180 = scmp.ne.s32.totalorder %s169, %s170
      %p181 = scmp.eq.s32.totalorder %s21, 0
      %p182 = por %p180, %p181
      %p183 = scmp.ne.s32.totalorder %s169, %s170
      %p184 = scmp.eq.s32.totalorder %s22, 1
      %p185 = por %p183, %p184
      %p187 = scmp.ne.s32.totalorder %s170, %s186
      %p188 = scmp.eq.s32.totalorder %s22, 0
      %p189 = por %p187, %p188
      %p190 = scmp.le.s32.totalorder 1, %s16
      %p191 = scmp.lt.s32.totalorder %s16, 3
      %p192 = pnand %p190, %p191
      %p193 = pneg %p192
      // Predicated region
      $region9: #{vivit_attention.3} parent=5 // pred_check
        _
      $region10: #{vivit_attention.3} parent=5 // pred_check_branch
        %195 = sbr.rel (%p192) target = $region12
      $region11: #{vivit_attention.3} parent=5 // pred_region
        %s196 = ssub.s32 %s16, 1
        // Predicated region
        $region13: #{vivit_attention.3} parent=11 // pred_check
          %p197 = pneg %p77
        $region14: #{vivit_attention.3} parent=11 // pred_check_branch
          %199 = sbr.rel (%p197) target = $region16
        $region15: #{vivit_attention.3} parent=11 // pred_region
          %s201 = ssub.s32 512, 512
          %202 = vsyncadd [#allocation5], %s201
          %s203 = sshll.u32 [#allocation4], 4
          %s204 = int_to_ptr.vmem [resolvable:$true] %s203
          %209 = dma.hbm_to_vmem [thread:$0]  %s1, 512, %s204, [#allocation5], 128, 128, 8
        $region16: #{vivit_attention.3} parent=11 // pred_fallthru
          _
        // Predicated region
        $region17: #{vivit_attention.3} parent=11 // pred_check
          %p210 = pneg %p98
        $region18: #{vivit_attention.3} parent=11 // pred_check_branch
          %212 = sbr.rel (%p210) target = $region20
        $region19: #{vivit_attention.3} parent=11 // pred_region
          _
        $region20: #{vivit_attention.3} parent=11 // pred_fallthru
          _
      $region12: #{vivit_attention.3} parent=5 // pred_fallthru
        _
      %p213 = scmp.lt.s32.totalorder %s16, 2
      // Predicated region
      $region21: #{vivit_attention.3} parent=5 // pred_check
        %p214 = pneg %p213
      $region22: #{vivit_attention.3} parent=5 // pred_check_branch
        %216 = sbr.rel (%p214) target = $region24
      $region23: #{vivit_attention.3} parent=5 // pred_region
        // Predicated region
        $region25: #{vivit_attention.3} parent=23 // pred_check
          %p217 = pneg %p50
        $region26: #{vivit_attention.3} parent=23 // pred_check_branch
          %219 = sbr.rel (%p217) target = $region28
        $region27: #{vivit_attention.3} parent=23 // pred_region
          %s220 = sand.u32 %s40, 1
          %s221 = scalar_lea.sflag [#allocation3], %s220
          %s222 = sand.u32 %s40, 1
          %s223 = smul.addr %s222, 8
          %s224 = scalar_lea.vmem [#allocation2], %s223
          %s226 = ssub.s32 128, 128
          %227 = vsyncadd %s221, %s226
          %s228 = sadd.s32 %s24, %s23
          %s229 = smul.addr %s228, 128
          %s230 = scalar_lea.hbm %s0, %s229
          %s232 = sshll.u32 %s224, 4
          %s233 = int_to_ptr.vmem [resolvable:$true] %s232
          %235 = dma.hbm_to_vmem [thread:$0]  %s230, 128, %s233, %s221
        $region28: #{vivit_attention.3} parent=23 // pred_fallthru
          _
      $region24: #{vivit_attention.3} parent=5 // pred_fallthru
        _
      %p236 = scmp.le.s32.totalorder 1, %s16
      %p237 = scmp.lt.s32.totalorder %s16, 3
      %p238 = pnand %p236, %p237
      %p239 = pneg %p238
      // Predicated region
      $region29: #{vivit_attention.3} parent=5 // pred_check
        _
      $region30: #{vivit_attention.3} parent=5 // pred_check_branch
        %241 = sbr.rel (%p238) target = $region32
      $region31: #{vivit_attention.3} parent=5 // pred_region
        %s242 = ssub.s32 %s16, 1
        %s243 = sand.u32 %s43, 1
        %s244 = scalar_lea.sflag [#allocation3], %s243
        %s245 = sand.u32 %s43, 1
        %s246 = smul.addr %s245, 8
        %s247 = scalar_lea.vmem [#allocation2], %s246
        // Predicated region
        $region33: #{vivit_attention.3} parent=31 // pred_check
          %p248 = pneg %p56
        $region34: #{vivit_attention.3} parent=31 // pred_check_branch
          %250 = sbr.rel (%p248) target = $region36
        $region35: #{vivit_attention.3} parent=31 // pred_region
          %251 = dma.done %s244, 128
        $region36: #{vivit_attention.3} parent=31 // pred_fallthru
          _
        // Predicated region
        $region37: #{vivit_attention.3} parent=31 // pred_check
          %p252 = pneg %p77
        $region38: #{vivit_attention.3} parent=31 // pred_check_branch
          %254 = sbr.rel (%p252) target = $region40
        $region39: #{vivit_attention.3} parent=31 // pred_region
          %255 = dma.done [#allocation5], 512
        $region40: #{vivit_attention.3} parent=31 // pred_fallthru
          _
        %s256 = sand.u32 %s43, 1
        %s257 = scalar_lea.sflag [#allocation3], %s256
        %s258 = sand.u32 %s43, 1
        %s259 = smul.addr %s258, 8
        %s260 = scalar_lea.vmem [#allocation2], %s259
        %p261 = pneg %p56
        %p262 = pneg %p53
        %p263 = pneg %p77
        %p264 = pneg %p74
        %p265 = pneg %p98
        %p266 = pneg %p95
        %p267 = pneg %p126
        %p268 = pneg %p123
        %p269 = scmp.lt.s32.totalorder %s25, 1
        %s270 = scalar_select %p269, %s25, 1
        %p271 = scmp.lt.s32.totalorder %s26, 0
        %s272 = scalar_select %p271, %s26, 0
        %s273 = sadd.s32 %s272, %s270
        %s274 = smul.addr %s273, 8
        %s275 = scalar_lea.vmem %s3, %s274
        %p276 = pneg %p154
        %p277 = pneg %p151
        %p278 = scmp.lt.s32.totalorder %s25, 1
        %s279 = scalar_select %p278, %s25, 1
        %p280 = scmp.lt.s32.totalorder %s26, 0
        %s281 = scalar_select %p280, %s26, 0
        %s282 = sadd.s32 %s281, %s279
        %s283 = smul.addr %s282, 8
        %s284 = scalar_lea.vmem %s4, %s283
        %p285 = pneg %p182
        %p286 = pneg %p179
        %p287 = scmp.lt.s32.totalorder %s25, 1
        %s288 = scalar_select %p287, %s25, 1
        %p289 = scmp.lt.s32.totalorder %s26, 0
        %s290 = scalar_select %p289, %s26, 0
        %s291 = sadd.s32 %s290, %s288
        %s292 = smul.addr %s291, 8
        %s293 = scalar_lea.vmem %s5, %s292
        %p294 = scmp.lt.s32.totalorder %s25, 1
        %s295 = scalar_select %p294, %s25, 1
        %p296 = scmp.lt.s32.totalorder %s26, 0
        %s297 = scalar_select %p296, %s26, 0
        %s298 = sadd.s32 %s297, %s295
        %s299 = smul.addr %s298, 8
        %s300 = scalar_lea.vmem %s3, %s299
        %p301 = scmp.lt.s32.totalorder %s25, 1
        %s302 = scalar_select %p301, %s25, 1
        %p303 = scmp.lt.s32.totalorder %s26, 0
        %s304 = scalar_select %p303, %s26, 0
        %s305 = sadd.s32 %s304, %s302
        %s306 = smul.addr %s305, 8
        %s307 = scalar_lea.vmem %s4, %s306
        %p308 = scmp.lt.s32.totalorder %s25, 1
        %s309 = scalar_select %p308, %s25, 1
        %p310 = scmp.lt.s32.totalorder %s26, 0
        %s311 = scalar_select %p310, %s26, 0
        %s312 = sadd.s32 %s311, %s309
        %s313 = smul.addr %s312, 8
        %s314 = scalar_lea.vmem %s5, %s313
        %v315 = vld [vmem:[%s247] sm:$0xff]
        %v316 = vld [vmem:[#allocation4] sm:$0xff]
        %v317 = vld [vmem:[#allocation4 + $0x8] sm:$0xff]
        %v318 = vld [vmem:[#allocation4 + $0x10] sm:$0xff]
        %v319 = vld [vmem:[#allocation4 + $0x18] sm:$0xff]
        %v320 = vld [vmem:[%s2] sm:$0x1]
        %v322 = vlaneseq
        %v323 = vshrl.u32 %v322, 7
        %v324 = vsub.s32 0, %v323
        %v325 = vrot.slane %v320, %v324
        %vm327 = vcmask 261120
        %v329 = vsel %vm327, %v315, 0
        %331 = vmatprep.subr.mxu0 0.0
        %332 = vmatpush1.msra.mxu0 0.0
        %333 = vmatprep.subr.mxu0 0.0
        %334 = vmatpush1.msra.mxu0 0.0
        %335 = vmatprep.subr.mxu0 0.0
        %336 = vmatpush1.msra.mxu0 0.0
        %337 = vmatprep.subr.mxu0 0.0
        %338 = vmatpush1.msra.mxu0 0.0
        %339 = vmatprep.subr.mxu0 0.0
        %340 = vmatpush1.msra.mxu0 0.0
        %341 = vmatprep.subr.mxu0 0.0
        %342 = vmatpush1.msra.mxu0 0.0
        %343 = vmatprep.subr.mxu0 0.0
        %344 = vmatpush1.msra.mxu0 0.0
        %345 = vmatprep.subr.mxu0 0.0
        %346 = vmatpush1.msra.mxu0 0.0
        %347 = vmatprep.subr.mxu0 0.0
        %348 = vmatpush1.msra.mxu0 0.0
        %349 = vmatprep.subr.mxu0 0.0
        %350 = vmatpush1.msra.mxu0 0.0
        %351 = vmatprep.subr.mxu0 0.0
        %352 = vmatpush1.msra.mxu0 0.0
        %353 = vmatprep.subr.mxu0 0.0
        %354 = vmatpush1.msra.mxu0 0.0
        %355 = vmatprep.subr.mxu0 0.0
        %356 = vmatpush1.msra.mxu0 %v319
        %357 = vmatprep.subr.mxu0 0.0
        %358 = vmatpush1.msra.mxu0 %v318
        %359 = vmatprep.subr.mxu0 0.0
        %360 = vmatpush1.msra.mxu0 %v317
        %361 = vmatprep.subr.mxu0 0.0
        %362 = vmatpush1.msra.mxu0 %v316
        %363 = vmatprep.subr.mxu0 0.0
        %364 = vmatpush2.msra.mxu0 0.0
        %365 = vmatprep.subr.mxu0 0.0
        %366 = vmatpush2.msra.mxu0 0.0
        %367 = vmatprep.subr.mxu0 0.0
        %368 = vmatpush2.msra.mxu0 0.0
        %369 = vmatprep.subr.mxu0 0.0
        %370 = vmatpush2.msra.mxu0 0.0
        %371 = vmatprep.subr.mxu0 0.0
        %372 = vmatpush2.msra.mxu0 0.0
        %373 = vmatprep.subr.mxu0 0.0
        %374 = vmatpush2.msra.mxu0 0.0
        %375 = vmatprep.subr.mxu0 0.0
        %376 = vmatpush2.msra.mxu0 0.0
        %377 = vmatprep.subr.mxu0 0.0
        %378 = vmatpush2.msra.mxu0 0.0
        %379 = vmatprep.subr.mxu0 0.0
        %380 = vmatpush2.msra.mxu0 0.0
        %381 = vmatprep.subr.mxu0 0.0
        %382 = vmatpush2.msra.mxu0 0.0
        %383 = vmatprep.subr.mxu0 0.0
        %384 = vmatpush2.msra.mxu0 0.0
        %385 = vmatprep.subr.mxu0 0.0
        %386 = vmatpush2.msra.mxu0 0.0
        %387 = vmatprep.subr.mxu0 0.0
        %388 = vmatpush2.msra.mxu0 0.0
        %389 = vmatprep.subr.mxu0 0.0
        %390 = vmatpush2.msra.mxu0 0.0
        %391 = vmatprep.subr.mxu0 0.0
        %392 = vmatpush2.msra.mxu0 0.0
        %393 = vmatprep.subr.mxu0 0.0
        %394 = vmatpush2.msra.mxu0 0.0
        %395 = vmatprep.mubr.f32.mxu0 0.0
        %396 = vmatmul.mubr.f32.gmra.mxu0 %v329
        %v397 = vpop.f32.mrf.mxu0
        %v398 = vadd.f32 %v325, %v397
        %v399 = vpop.f32.mrf.mxu0
        %400 = vdwg.mxu0
        %401 = vst.msk [vmem:[%s300] sm:$0xff] %vm327, %v398
        %403 = vrot.lane.b32.xlu0 %v398, 96
        %v404 = vpop.permute.xlu0 %403
        %406 = vst.msk [vmem:[%s307] sm:$0xff] %vm327, %v404
        %407 = vrot.lane.b32.xlu0 %v398, 64
        %v408 = vpop.permute.xlu0 %407
        %410 = vst.msk [vmem:[%s314] sm:$0xff] %vm327, %v408
        %p411 = scmp.lt.s32.totalorder %s25, 1
        %s412 = scalar_select %p411, %s25, 1
        %p413 = scmp.lt.s32.totalorder %s26, 0
        %s414 = scalar_select %p413, %s26, 0
        %s415 = sadd.s32 %s414, %s412
        %s416 = smul.addr %s415, 8
        %s417 = scalar_lea.vmem %s3, %s416
        %p418 = scmp.lt.s32.totalorder %s25, 1
        %s419 = scalar_select %p418, %s25, 1
        %p420 = scmp.lt.s32.totalorder %s26, 0
        %s421 = scalar_select %p420, %s26, 0
        %s422 = sadd.s32 %s421, %s419
        %s423 = smul.addr %s422, 8
        %s424 = scalar_lea.vmem %s4, %s423
        %p425 = scmp.lt.s32.totalorder %s25, 1
        %s426 = scalar_select %p425, %s25, 1
        %p427 = scmp.lt.s32.totalorder %s26, 0
        %s428 = scalar_select %p427, %s26, 0
        %s429 = sadd.s32 %s428, %s426
        %s430 = smul.addr %s429, 8
        %s431 = scalar_lea.vmem %s5, %s430
        // Predicated region
        $region41: #{vivit_attention.3} parent=31 // pred_check
          %p432 = pneg %p123
        $region42: #{vivit_attention.3} parent=31 // pred_check_branch
          %434 = sbr.rel (%p432) target = $region44
        $region43: #{vivit_attention.3} parent=31 // pred_region
          _
        $region44: #{vivit_attention.3} parent=31 // pred_fallthru
          _
        // Predicated region
        $region45: #{vivit_attention.3} parent=31 // pred_check
          %p435 = pneg %p151
        $region46: #{vivit_attention.3} parent=31 // pred_check_branch
          %437 = sbr.rel (%p435) target = $region48
        $region47: #{vivit_attention.3} parent=31 // pred_region
          _
        $region48: #{vivit_attention.3} parent=31 // pred_fallthru
          _
        // Predicated region
        $region49: #{vivit_attention.3} parent=31 // pred_check
          %p438 = pneg %p179
        $region50: #{vivit_attention.3} parent=31 // pred_check_branch
          %440 = sbr.rel (%p438) target = $region52
        $region51: #{vivit_attention.3} parent=31 // pred_region
          _
        $region52: #{vivit_attention.3} parent=31 // pred_fallthru
          _
      $region32: #{vivit_attention.3} parent=5 // pred_fallthru
        _
      %p441 = scmp.le.s32.totalorder 2, %s16
      // Predicated region
      $region53: #{vivit_attention.3} parent=5 // pred_check
        %p442 = pneg %p441
      $region54: #{vivit_attention.3} parent=5 // pred_check_branch
        %444 = sbr.rel (%p442) target = $region56
      $region55: #{vivit_attention.3} parent=5 // pred_region
        %s445 = ssub.s32 %s16, 2
        // Predicated region
        $region57: #{vivit_attention.3} parent=55 // pred_check
          %p446 = pneg %p129
        $region58: #{vivit_attention.3} parent=55 // pred_check_branch
          %448 = sbr.rel (%p446) target = $region60
        $region59: #{vivit_attention.3} parent=55 // pred_region
          %p449 = scmp.lt.s32.totalorder %s27, 1
          %s450 = scalar_select %p449, %s27, 1
          %p451 = scmp.lt.s32.totalorder %s28, 0
          %s452 = scalar_select %p451, %s28, 0
          %s453 = sadd.s32 %s452, %s450
          %s454 = smul.addr %s453, 8
          %s455 = scalar_lea.vmem %s3, %s454
        $region60: #{vivit_attention.3} parent=55 // pred_fallthru
          _
        // Predicated region
        $region61: #{vivit_attention.3} parent=55 // pred_check
          %p456 = pneg %p157
        $region62: #{vivit_attention.3} parent=55 // pred_check_branch
          %458 = sbr.rel (%p456) target = $region64
        $region63: #{vivit_attention.3} parent=55 // pred_region
          %p459 = scmp.lt.s32.totalorder %s27, 1
          %s460 = scalar_select %p459, %s27, 1
          %p461 = scmp.lt.s32.totalorder %s28, 0
          %s462 = scalar_select %p461, %s28, 0
          %s463 = sadd.s32 %s462, %s460
          %s464 = smul.addr %s463, 8
          %s465 = scalar_lea.vmem %s4, %s464
        $region64: #{vivit_attention.3} parent=55 // pred_fallthru
          _
        // Predicated region
        $region65: #{vivit_attention.3} parent=55 // pred_check
          %p466 = pneg %p185
        $region66: #{vivit_attention.3} parent=55 // pred_check_branch
          %468 = sbr.rel (%p466) target = $region68
        $region67: #{vivit_attention.3} parent=55 // pred_region
          %p469 = scmp.lt.s32.totalorder %s27, 1
          %s470 = scalar_select %p469, %s27, 1
          %p471 = scmp.lt.s32.totalorder %s28, 0
          %s472 = scalar_select %p471, %s28, 0
          %s473 = sadd.s32 %s472, %s470
          %s474 = smul.addr %s473, 8
          %s475 = scalar_lea.vmem %s5, %s474
        $region68: #{vivit_attention.3} parent=55 // pred_fallthru
          _
      $region56: #{vivit_attention.3} parent=5 // pred_fallthru
        _
    $region6: #{vivit_attention.3} parent=1 // loop_footer
      %s20 = sadd.s32 1, %s16
    $region7: #{vivit_attention.3} parent=1 // loop_footer_branch
      %15 = sbr.rel target = $region3
    $region8: #{vivit_attention.3} parent=1 // loop_exit
      _
    %476 = vsyncpa [#allocation3], 1
    %s477 = scalar_lea.sflag [#allocation3], 1
    %478 = vsyncpa %s477, 1
    %479 = vsyncpa [#allocation5], 1

// kernel: vivit_attention.5
$region0: #{vivit_attention.5}
  #allocation0 [shape = 'u32[]', space=smem, size = 0x4, offset = 0x4, fixed_abs, tag = 'smem constant byte address 0x4 - core index']
  #allocation1 [shape = 'u32[144,128]{1,0:T(1,128)}', space=vmem, size = 0x12000, scoped, tag = 'internal scratch']
  %s0 = inlined_call_operand.vmem [shape: f32[16,32], index: 0, kind: input, shape index: {}]
  %s1 = inlined_call_operand.vmem [shape: f32[32,32], index: 1, kind: input, shape index: {}]
  %s2 = inlined_call_operand.vmem [shape: f32[1,32], index: 2, kind: input, shape index: {}]
  %s3 = inlined_call_operand.hbm [shape: f32[16,32], index: 3, kind: output, shape index: {}]
  %s4 = sld [smem:[#allocation0]]
  $region22: #{vivit_attention.5} parent=0
    _
  %s6 = ssub.s32 1, %s4
  %s7 = scalar_select 0, %s6, %s4
  $region1: #{vivit_attention.5} parent=0
    #allocation2 [shape = 'u8[8192]{0}', space=vmem, size = 0x2000, scoped, tag = 'output window, operand 0, single buffered']
    #allocation3 [shape = 's32[1]{0}', space=sflag, size = 0x4, scoped, tag = 'scoped memory for vivit_attention.5']
    %8 = vsyncpa [#allocation3], 0
    // Predicated region
    $region2: #{vivit_attention.5} parent=1 // pred_check
      _
    $region3: #{vivit_attention.5} parent=1 // pred_check_branch
      %10 = sbr.rel (0) target = $region5
    $region4: #{vivit_attention.5} parent=1 // pred_region
      _
    $region5: #{vivit_attention.5} parent=1 // pred_fallthru
      _
    // Predicated region
    $region6: #{vivit_attention.5} parent=1 // pred_check
      _
    $region7: #{vivit_attention.5} parent=1 // pred_check_branch
      %12 = sbr.rel (0) target = $region9
    $region8: #{vivit_attention.5} parent=1 // pred_region
      _
    $region9: #{vivit_attention.5} parent=1 // pred_fallthru
      _
    // Predicated region
    $region10: #{vivit_attention.5} parent=1 // pred_check
      _
    $region11: #{vivit_attention.5} parent=1 // pred_check_branch
      %14 = sbr.rel (0) target = $region13
    $region12: #{vivit_attention.5} parent=1 // pred_region
      _
    $region13: #{vivit_attention.5} parent=1 // pred_fallthru
      _
    %v15 = vld [vmem:[%s0] sm:$0xff]
    %v16 = vld [vmem:[%s0 + $0x8] sm:$0xff]
    %v17 = vld [vmem:[%s1] sm:$0xff]
    %v18 = vld [vmem:[%s1 + $0x8] sm:$0xff]
    %v19 = vld [vmem:[%s1 + $0x10] sm:$0xff]
    %v20 = vld [vmem:[%s1 + $0x18] sm:$0xff]
    %v21 = vld [vmem:[%s2] sm:$0x1]
    %v23 = vlaneseq
    %v24 = vshrl.u32 %v23, 7
    %v25 = vsub.s32 0, %v24
    %v26 = vrot.slane %v21, %v25
    %vm28 = vcmask 261120
    %v30 = vsel %vm28, %v15, 0
    %v33 = vsel %vm28, %v16, 0
    %35 = vmatprep.subr.mxu0 0.0
    %36 = vmatpush1.msra.mxu0 0.0
    %37 = vmatprep.subr.mxu0 0.0
    %38 = vmatpush1.msra.mxu0 0.0
    %39 = vmatprep.subr.mxu0 0.0
    %40 = vmatpush1.msra.mxu0 0.0
    %41 = vmatprep.subr.mxu0 0.0
    %42 = vmatpush1.msra.mxu0 0.0
    %43 = vmatprep.subr.mxu0 0.0
    %44 = vmatpush1.msra.mxu0 0.0
    %45 = vmatprep.subr.mxu0 0.0
    %46 = vmatpush1.msra.mxu0 0.0
    %47 = vmatprep.subr.mxu0 0.0
    %48 = vmatpush1.msra.mxu0 0.0
    %49 = vmatprep.subr.mxu0 0.0
    %50 = vmatpush1.msra.mxu0 0.0
    %51 = vmatprep.subr.mxu0 0.0
    %52 = vmatpush1.msra.mxu0 0.0
    %53 = vmatprep.subr.mxu0 0.0
    %54 = vmatpush1.msra.mxu0 0.0
    %55 = vmatprep.subr.mxu0 0.0
    %56 = vmatpush1.msra.mxu0 0.0
    %57 = vmatprep.subr.mxu0 0.0
    %58 = vmatpush1.msra.mxu0 0.0
    %59 = vmatprep.subr.mxu0 0.0
    %60 = vmatpush1.msra.mxu0 %v20
    %61 = vmatprep.subr.mxu0 0.0
    %62 = vmatpush1.msra.mxu0 %v19
    %63 = vmatprep.subr.mxu0 0.0
    %64 = vmatpush1.msra.mxu0 %v18
    %65 = vmatprep.subr.mxu0 0.0
    %66 = vmatpush1.msra.mxu0 %v17
    %67 = vmatprep.subr.mxu0 0.0
    %68 = vmatpush2.msra.mxu0 0.0
    %69 = vmatprep.subr.mxu0 0.0
    %70 = vmatpush2.msra.mxu0 0.0
    %71 = vmatprep.subr.mxu0 0.0
    %72 = vmatpush2.msra.mxu0 0.0
    %73 = vmatprep.subr.mxu0 0.0
    %74 = vmatpush2.msra.mxu0 0.0
    %75 = vmatprep.subr.mxu0 0.0
    %76 = vmatpush2.msra.mxu0 0.0
    %77 = vmatprep.subr.mxu0 0.0
    %78 = vmatpush2.msra.mxu0 0.0
    %79 = vmatprep.subr.mxu0 0.0
    %80 = vmatpush2.msra.mxu0 0.0
    %81 = vmatprep.subr.mxu0 0.0
    %82 = vmatpush2.msra.mxu0 0.0
    %83 = vmatprep.subr.mxu0 0.0
    %84 = vmatpush2.msra.mxu0 0.0
    %85 = vmatprep.subr.mxu0 0.0
    %86 = vmatpush2.msra.mxu0 0.0
    %87 = vmatprep.subr.mxu0 0.0
    %88 = vmatpush2.msra.mxu0 0.0
    %89 = vmatprep.subr.mxu0 0.0
    %90 = vmatpush2.msra.mxu0 0.0
    %91 = vmatprep.subr.mxu0 0.0
    %92 = vmatpush2.msra.mxu0 0.0
    %93 = vmatprep.subr.mxu0 0.0
    %94 = vmatpush2.msra.mxu0 0.0
    %95 = vmatprep.subr.mxu0 0.0
    %96 = vmatpush2.msra.mxu0 0.0
    %97 = vmatprep.subr.mxu0 0.0
    %98 = vmatpush2.msra.mxu0 0.0
    %99 = vmatprep.mubr.f32.mxu0 0.0
    %100 = vmatmul.mubr.f32.gmra.mxu0 %v30
    %v101 = vpop.f32.mrf.mxu0
    %v102 = vadd.f32 %v26, %v101
    %v103 = vpop.f32.mrf.mxu0
    %104 = vmatprep.mubr.f32.mxu0 0.0
    %105 = vmatmul.mubr.f32.gmra.mxu0 %v33
    %v106 = vpop.f32.mrf.mxu0
    %v107 = vadd.f32 %v26, %v106
    %v108 = vpop.f32.mrf.mxu0
    %109 = vdwg.mxu0
    %110 = vst.msk [vmem:[#allocation2] sm:$0xff] %vm28, %v102
    %111 = vst.msk [vmem:[#allocation2 + $0x8] sm:$0xff] %vm28, %v107
    // Predicated region
    $region14: #{vivit_attention.5} parent=1 // pred_check
      _
    $region15: #{vivit_attention.5} parent=1 // pred_check_branch
      %113 = sbr.rel (0) target = $region17
    $region16: #{vivit_attention.5} parent=1 // pred_region
      %s115 = ssub.s32 256, 256
      %116 = vsyncadd [#allocation3], %s115
      %s117 = sshll.u32 [#allocation2], 4
      %s118 = int_to_ptr.vmem [resolvable:$true] %s117
      %123 = dma.vmem_to_hbm [thread:$0]  %s118, 256, %s3, [#allocation3], 128, 128, 8
    $region17: #{vivit_attention.5} parent=1 // pred_fallthru
      _
    // Predicated region
    $region18: #{vivit_attention.5} parent=1 // pred_check
      _
    $region19: #{vivit_attention.5} parent=1 // pred_check_branch
      %125 = sbr.rel (0) target = $region21
    $region20: #{vivit_attention.5} parent=1 // pred_region
      %126 = dma.done [#allocation3], 256
    $region21: #{vivit_attention.5} parent=1 // pred_fallthru
      _
    %127 = vsyncpa [#allocation3], 1

// kernel: vivit_attention.4
$region0: #{vivit_attention.4}
  #allocation0 [shape = 'u32[]', space=smem, size = 0x4, offset = 0x4, fixed_abs, tag = 'smem constant byte address 0x4 - core index']
  #allocation1 [shape = 'u32[144,128]{1,0:T(1,128)}', space=vmem, size = 0x12000, scoped, tag = 'internal scratch']
  #allocation2 [shape = 'f32[8,4]{1,0:T(8,128)}', space=vmem, size = 0x1000, scoped, tag = 'scratch operand']
  #allocation3 [shape = 'f32[8,4]{1,0:T(8,128)}', space=vmem, size = 0x1000, scoped, tag = 'scratch operand']
  #allocation4 [shape = 'f32[8,32]{1,0:T(8,128)}', space=vmem, size = 0x1000, scoped, tag = 'scratch operand']
  %s0 = inlined_call_operand.vmem [shape: f32[2,1,8,32], index: 0, kind: input, shape index: {}]
  %s1 = inlined_call_operand.vmem [shape: f32[2,1,8,32], index: 1, kind: input, shape index: {}]
  %s2 = inlined_call_operand.vmem [shape: f32[2,1,8,32], index: 2, kind: input, shape index: {}]
  %s3 = inlined_call_operand.vmem [shape: f32[2,8,32], index: 3, kind: output, shape index: {}]
  %s4 = sld [smem:[#allocation0]]
  $region53: #{vivit_attention.4} parent=0
    _
  %s6 = ssub.s32 1, %s4
  %s7 = scalar_select 0, %s6, %s4
  loop: start=0, step=1, limit=4
  $region2: #{vivit_attention.4} parent=0 // loop_pre_header
    _
  $region3: #{vivit_attention.4} parent=0 // loop_header
    %s9 = sphi 0, %s13
    %p10 = scmp.ge.s32.totalorder %s9, 4
    %s16 = sphi 0, %s42
    %s17 = sphi 0, %s38
    %s18 = sphi 0, %s34
    %s19 = sphi 0, %s30
    %s20 = sphi 0, %s16
    %s21 = sphi 0, %s17
    %s22 = sphi 0, %s18
    %s23 = sphi 0, %s19
    %s24 = sphi 0, %s20
    %s25 = sphi 0, %s21
    %s26 = sphi 0, %s22
    %s27 = sphi 0, %s23
    %s49 = sphi 0, %s51
    %s52 = sphi 0, %s49
    %s53 = sphi 0, %s52
    %s69 = sphi 0, %s53
    %s79 = sphi 0, %s81
    %s82 = sphi 0, %s79
    %s83 = sphi 0, %s82
    %s99 = sphi 0, %s83
    %s109 = sphi 0, %s111
    %s112 = sphi 0, %s109
    %s113 = sphi 0, %s112
    %s129 = sphi 0, %s113
    %s139 = sphi 0, %s141
    %s142 = sphi 0, %s139
    %s143 = sphi 0, %s142
    %s159 = sphi 0, %s143
  $region4: #{vivit_attention.4} parent=0 // loop_header_branch
    %12 = sbr.rel (%p10) target = $region8
  $region5: #{vivit_attention.4} parent=0 // loop_body
    %s14 = ssub.s32 %s9, 1
    %s15 = ssub.s32 %s9, 2
    %s28 = sadd.s32 1, %s19
    %p29 = scmp.ge.s32.totalorder %s28, 1
    %s30 = scalar_select %p29, 0, %s28
    %s31 = sadd.s32 1, %s18
    %s32 = scalar_select %p29, %s31, %s18
    %p33 = scmp.ge.s32.totalorder %s32, 1
    %s34 = scalar_select %p33, 0, %s32
    %s35 = sadd.s32 1, %s17
    %s36 = scalar_select %p33, %s35, %s17
    %p37 = scmp.ge.s32.totalorder %s36, 1
    %s38 = scalar_select %p37, 0, %s36
    %s39 = sadd.s32 1, %s16
    %s40 = scalar_select %p37, %s39, %s16
    %p41 = scmp.ge.s32.totalorder %s40, 2
    %s42 = scalar_select %p41, 0, %s40
    %s43 = ssub.s32 %s16, %s42
    %s44 = ssub.s32 %s17, %s38
    %s45 = sor.u32 %s43, %s44
    %s46 = ssub.s32 %s18, %s34
    %s47 = sor.u32 %s45, %s46
    %p48 = scmp.eq.s32.totalorder %s47, 0
    %s50 = sadd.s32 %s49, 1
    %s51 = scalar_select %p48, %s49, %s50
    %p54 = pneg %p48
    %p55 = scmp.eq.s32.totalorder %s9, 1
    %p56 = por %p54, %p55
    %p57 = scmp.ne.s32.totalorder %s49, %s52
    %p58 = scmp.eq.s32.totalorder %s9, 0
    %p59 = por %p57, %p58
    %p60 = scmp.ne.s32.totalorder %s49, %s52
    %p61 = scmp.eq.s32.totalorder %s14, 1
    %p62 = por %p60, %p61
    %p63 = scmp.ne.s32.totalorder %s52, %s53
    %p64 = scmp.eq.s32.totalorder %s14, 0
    %p65 = por %p63, %p64
    %p66 = scmp.ne.s32.totalorder %s52, %s53
    %p67 = scmp.eq.s32.totalorder %s15, 1
    %p68 = por %p66, %p67
    %p70 = scmp.ne.s32.totalorder %s53, %s69
    %p71 = scmp.eq.s32.totalorder %s15, 0
    %p72 = por %p70, %p71
    %s73 = ssub.s32 %s16, %s42
    %s74 = ssub.s32 %s17, %s38
    %s75 = sor.u32 %s73, %s74
    %s76 = ssub.s32 %s19, %s30
    %s77 = sor.u32 %s75, %s76
    %p78 = scmp.eq.s32.totalorder %s77, 0
    %s80 = sadd.s32 %s79, 1
    %s81 = scalar_select %p78, %s79, %s80
    %p84 = pneg %p78
    %p85 = scmp.eq.s32.totalorder %s9, 1
    %p86 = por %p84, %p85
    %p87 = scmp.ne.s32.totalorder %s79, %s82
    %p88 = scmp.eq.s32.totalorder %s9, 0
    %p89 = por %p87, %p88
    %p90 = scmp.ne.s32.totalorder %s79, %s82
    %p91 = scmp.eq.s32.totalorder %s14, 1
    %p92 = por %p90, %p91
    %p93 = scmp.ne.s32.totalorder %s82, %s83
    %p94 = scmp.eq.s32.totalorder %s14, 0
    %p95 = por %p93, %p94
    %p96 = scmp.ne.s32.totalorder %s82, %s83
    %p97 = scmp.eq.s32.totalorder %s15, 1
    %p98 = por %p96, %p97
    %p100 = scmp.ne.s32.totalorder %s83, %s99
    %p101 = scmp.eq.s32.totalorder %s15, 0
    %p102 = por %p100, %p101
    %s103 = ssub.s32 %s16, %s42
    %s104 = ssub.s32 %s17, %s38
    %s105 = sor.u32 %s103, %s104
    %s106 = ssub.s32 %s19, %s30
    %s107 = sor.u32 %s105, %s106
    %p108 = scmp.eq.s32.totalorder %s107, 0
    %s110 = sadd.s32 %s109, 1
    %s111 = scalar_select %p108, %s109, %s110
    %p114 = pneg %p108
    %p115 = scmp.eq.s32.totalorder %s9, 1
    %p116 = por %p114, %p115
    %p117 = scmp.ne.s32.totalorder %s109, %s112
    %p118 = scmp.eq.s32.totalorder %s9, 0
    %p119 = por %p117, %p118
    %p120 = scmp.ne.s32.totalorder %s109, %s112
    %p121 = scmp.eq.s32.totalorder %s14, 1
    %p122 = por %p120, %p121
    %p123 = scmp.ne.s32.totalorder %s112, %s113
    %p124 = scmp.eq.s32.totalorder %s14, 0
    %p125 = por %p123, %p124
    %p126 = scmp.ne.s32.totalorder %s112, %s113
    %p127 = scmp.eq.s32.totalorder %s15, 1
    %p128 = por %p126, %p127
    %p130 = scmp.ne.s32.totalorder %s113, %s129
    %p131 = scmp.eq.s32.totalorder %s15, 0
    %p132 = por %p130, %p131
    %s133 = ssub.s32 %s16, %s42
    %s134 = ssub.s32 %s18, %s34
    %s135 = sor.u32 %s133, %s134
    %s136 = ssub.s32 %s17, %s38
    %s137 = sor.u32 %s135, %s136
    %p138 = scmp.eq.s32.totalorder %s137, 0
    %s140 = sadd.s32 %s139, 1
    %s141 = scalar_select %p138, %s139, %s140
    %p144 = pneg %p138
    %p145 = scmp.eq.s32.totalorder %s9, 1
    %p146 = por %p144, %p145
    %p147 = scmp.ne.s32.totalorder %s139, %s142
    %p148 = scmp.eq.s32.totalorder %s9, 0
    %p149 = por %p147, %p148
    %p150 = scmp.ne.s32.totalorder %s139, %s142
    %p151 = scmp.eq.s32.totalorder %s14, 1
    %p152 = por %p150, %p151
    %p153 = scmp.ne.s32.totalorder %s142, %s143
    %p154 = scmp.eq.s32.totalorder %s14, 0
    %p155 = por %p153, %p154
    %p156 = scmp.ne.s32.totalorder %s142, %s143
    %p157 = scmp.eq.s32.totalorder %s15, 1
    %p158 = por %p156, %p157
    %p160 = scmp.ne.s32.totalorder %s143, %s159
    %p161 = scmp.eq.s32.totalorder %s15, 0
    %p162 = por %p160, %p161
    %p163 = scmp.le.s32.totalorder 1, %s9
    %p164 = scmp.lt.s32.totalorder %s9, 3
    %p165 = pnand %p163, %p164
    %p166 = pneg %p165
    // Predicated region
    $region9: #{vivit_attention.4} parent=5 // pred_check
      _
    $region10: #{vivit_attention.4} parent=5 // pred_check_branch
      %168 = sbr.rel (%p165) target = $region12
    $region11: #{vivit_attention.4} parent=5 // pred_region
      %s169 = ssub.s32 %s9, 1
    $region12: #{vivit_attention.4} parent=5 // pred_fallthru
      _
    %p170 = scmp.lt.s32.totalorder %s9, 2
    // Predicated region
    $region13: #{vivit_attention.4} parent=5 // pred_check
      %p171 = pneg %p170
    $region14: #{vivit_attention.4} parent=5 // pred_check_branch
      %173 = sbr.rel (%p171) target = $region16
    $region15: #{vivit_attention.4} parent=5 // pred_region
      // Predicated region
      $region17: #{vivit_attention.4} parent=15 // pred_check
        %p174 = pneg %p59
      $region18: #{vivit_attention.4} parent=15 // pred_check_branch
        %176 = sbr.rel (%p174) target = $region20
      $region19: #{vivit_attention.4} parent=15 // pred_region
        %p177 = scmp.lt.s32.totalorder %s16, 1
        %s178 = scalar_select %p177, %s16, 1
        %p179 = scmp.lt.s32.totalorder %s17, 0
        %s180 = scalar_select %p179, %s17, 0
        %p181 = scmp.lt.s32.totalorder %s18, 0
        %s182 = scalar_select %p181, %s18, 0
        %s183 = sadd.s32 %s182, %s180
        %s184 = sadd.s32 %s183, %s178
        %s185 = smul.addr %s184, 8
        %s186 = scalar_lea.vmem %s0, %s185
      $region20: #{vivit_attention.4} parent=15 // pred_fallthru
        _
      // Predicated region
      $region21: #{vivit_attention.4} parent=15 // pred_check
        %p187 = pneg %p89
      $region22: #{vivit_attention.4} parent=15 // pred_check_branch
        %189 = sbr.rel (%p187) target = $region24
      $region23: #{vivit_attention.4} parent=15 // pred_region
        %p190 = scmp.lt.s32.totalorder %s16, 1
        %s191 = scalar_select %p190, %s16, 1
        %p192 = scmp.lt.s32.totalorder %s17, 0
        %s193 = scalar_select %p192, %s17, 0
        %p194 = scmp.lt.s32.totalorder %s19, 0
        %s195 = scalar_select %p194, %s19, 0
        %s196 = sadd.s32 %s195, %s193
        %s197 = sadd.s32 %s196, %s191
        %s198 = smul.addr %s197, 8
        %s199 = scalar_lea.vmem %s1, %s198
      $region24: #{vivit_attention.4} parent=15 // pred_fallthru
        _
      // Predicated region
      $region25: #{vivit_attention.4} parent=15 // pred_check
        %p200 = pneg %p119
      $region26: #{vivit_attention.4} parent=15 // pred_check_branch
        %202 = sbr.rel (%p200) target = $region28
      $region27: #{vivit_attention.4} parent=15 // pred_region
        %p203 = scmp.lt.s32.totalorder %s16, 1
        %s204 = scalar_select %p203, %s16, 1
        %p205 = scmp.lt.s32.totalorder %s17, 0
        %s206 = scalar_select %p205, %s17, 0
        %p207 = scmp.lt.s32.totalorder %s19, 0
        %s208 = scalar_select %p207, %s19, 0
        %s209 = sadd.s32 %s208, %s206
        %s210 = sadd.s32 %s209, %s204
        %s211 = smul.addr %s210, 8
        %s212 = scalar_lea.vmem %s2, %s211
      $region28: #{vivit_attention.4} parent=15 // pred_fallthru
        _
    $region16: #{vivit_attention.4} parent=5 // pred_fallthru
      _
    %p213 = scmp.le.s32.totalorder 1, %s9
    %p214 = scmp.lt.s32.totalorder %s9, 3
    %p215 = pnand %p213, %p214
    %p216 = pneg %p215
    // Predicated region
    $region29: #{vivit_attention.4} parent=5 // pred_check
      _
    $region30: #{vivit_attention.4} parent=5 // pred_check_branch
      %218 = sbr.rel (%p215) target = $region32
    $region31: #{vivit_attention.4} parent=5 // pred_region
      %s219 = ssub.s32 %s9, 1
      %p220 = scmp.lt.s32.totalorder %s20, 1
      %s221 = scalar_select %p220, %s20, 1
      %p222 = scmp.lt.s32.totalorder %s21, 0
      %s223 = scalar_select %p222, %s21, 0
      %p224 = scmp.lt.s32.totalorder %s22, 0
      %s225 = scalar_select %p224, %s22, 0
      %s226 = sadd.s32 %s225, %s223
      %s227 = sadd.s32 %s226, %s221
      %s228 = smul.addr %s227, 8
      %s229 = scalar_lea.vmem %s0, %s228
      %p230 = pneg %p65
      %p231 = pneg %p62
      %p232 = scmp.lt.s32.totalorder %s20, 1
      %s233 = scalar_select %p232, %s20, 1
      %p234 = scmp.lt.s32.totalorder %s21, 0
      %s235 = scalar_select %p234, %s21, 0
      %p236 = scmp.lt.s32.totalorder %s23, 0
      %s237 = scalar_select %p236, %s23, 0
      %s238 = sadd.s32 %s237, %s235
      %s239 = sadd.s32 %s238, %s233
      %s240 = smul.addr %s239, 8
      %s241 = scalar_lea.vmem %s1, %s240
      %p242 = pneg %p95
      %p243 = pneg %p92
      %p244 = scmp.lt.s32.totalorder %s20, 1
      %s245 = scalar_select %p244, %s20, 1
      %p246 = scmp.lt.s32.totalorder %s21, 0
      %s247 = scalar_select %p246, %s21, 0
      %p248 = scmp.lt.s32.totalorder %s23, 0
      %s249 = scalar_select %p248, %s23, 0
      %s250 = sadd.s32 %s249, %s247
      %s251 = sadd.s32 %s250, %s245
      %s252 = smul.addr %s251, 8
      %s253 = scalar_lea.vmem %s2, %s252
      %p254 = pneg %p125
      %p255 = pneg %p122
      %p256 = pneg %p155
      %p257 = pneg %p152
      %p258 = scmp.lt.s32.totalorder %s20, 1
      %s259 = scalar_select %p258, %s20, 1
      %p260 = scmp.lt.s32.totalorder %s22, 0
      %s261 = scalar_select %p260, %s22, 0
      %p262 = scmp.lt.s32.totalorder %s21, 0
      %s263 = scalar_select %p262, %s21, 0
      %s264 = sadd.s32 %s263, %s261
      %s265 = sadd.s32 %s264, %s259
      %s266 = smul.addr %s265, 8
      %s267 = scalar_lea.vmem %s3, %s266
      %p268 = scmp.lt.s32.totalorder %s20, 1
      %s269 = scalar_select %p268, %s20, 1
      %p270 = scmp.lt.s32.totalorder %s21, 0
      %s271 = scalar_select %p270, %s21, 0
      %p272 = scmp.lt.s32.totalorder %s22, 0
      %s273 = scalar_select %p272, %s22, 0
      %s274 = sadd.s32 %s273, %s271
      %s275 = sadd.s32 %s274, %s269
      %s276 = smul.addr %s275, 8
      %s277 = scalar_lea.vmem %s0, %s276
      %p278 = scmp.lt.s32.totalorder %s20, 1
      %s279 = scalar_select %p278, %s20, 1
      %p280 = scmp.lt.s32.totalorder %s21, 0
      %s281 = scalar_select %p280, %s21, 0
      %p282 = scmp.lt.s32.totalorder %s23, 0
      %s283 = scalar_select %p282, %s23, 0
      %s284 = sadd.s32 %s283, %s281
      %s285 = sadd.s32 %s284, %s279
      %s286 = smul.addr %s285, 8
      %s287 = scalar_lea.vmem %s1, %s286
      %p288 = scmp.lt.s32.totalorder %s20, 1
      %s289 = scalar_select %p288, %s20, 1
      %p290 = scmp.lt.s32.totalorder %s21, 0
      %s291 = scalar_select %p290, %s21, 0
      %p292 = scmp.lt.s32.totalorder %s23, 0
      %s293 = scalar_select %p292, %s23, 0
      %s294 = sadd.s32 %s293, %s291
      %s295 = sadd.s32 %s294, %s289
      %s296 = smul.addr %s295, 8
      %s297 = scalar_lea.vmem %s2, %s296
      %p298 = scmp.lt.s32.totalorder %s20, 1
      %s299 = scalar_select %p298, %s20, 1
      %p300 = scmp.lt.s32.totalorder %s22, 0
      %s301 = scalar_select %p300, %s22, 0
      %p302 = scmp.lt.s32.totalorder %s21, 0
      %s303 = scalar_select %p302, %s21, 0
      %s304 = sadd.s32 %s303, %s301
      %s305 = sadd.s32 %s304, %s299
      %s306 = smul.addr %s305, 8
      %s307 = scalar_lea.vmem %s3, %s306
      %p308 = scmp.eq.s32.totalorder %s23, 0
      // Predicated region
      $region33: #{vivit_attention.4} parent=31 // pred_check
        %p309 = pneg %p308
      $region34: #{vivit_attention.4} parent=31 // pred_check_branch
        %311 = sbr.rel (%p309) target = $region36
      $region35: #{vivit_attention.4} parent=31 // pred_region
        %vm312 = vcmask 31744
        %313 = vst.msk [vmem:[#allocation2] sm:$0xff] %vm312, -inf
        %314 = vst.msk [vmem:[#allocation3] sm:$0xff] %vm312, 0.0
        %vm315 = vcmask 261120
        %316 = vst.msk [vmem:[#allocation4] sm:$0xff] %vm315, 0.0
      $region36: #{vivit_attention.4} parent=31 // pred_fallthru
        _
      %v317 = vld [vmem:[%s277] sm:$0xff]
      %v318 = vld [vmem:[%s287] sm:$0xff]
      %v319 = vld [vmem:[%s297] sm:$0xff]
      %vm320 = vcmask 64512
      %v322 = vsel %vm320, %v317, 0
      %v325 = vsel %vm320, %v318, 0
      %327 = vmatprep.subr.mxu0 0.0
      %328 = vmatpush1.xpose.msra.mxu0 0.0
      %329 = vmatprep.subr.mxu0 0.0
      %330 = vmatpush1.xpose.msra.mxu0 0.0
      %331 = vmatprep.subr.mxu0 0.0
      %332 = vmatpush1.xpose.msra.mxu0 0.0
      %333 = vmatprep.subr.mxu0 0.0
      %334 = vmatpush1.xpose.msra.mxu0 0.0
      %335 = vmatprep.subr.mxu0 0.0
      %336 = vmatpush1.xpose.msra.mxu0 0.0
      %337 = vmatprep.subr.mxu0 0.0
      %338 = vmatpush1.xpose.msra.mxu0 0.0
      %339 = vmatprep.subr.mxu0 0.0
      %340 = vmatpush1.xpose.msra.mxu0 0.0
      %341 = vmatprep.subr.mxu0 0.0
      %342 = vmatpush1.xpose.msra.mxu0 0.0
      %343 = vmatprep.subr.mxu0 0.0
      %344 = vmatpush1.xpose.msra.mxu0 0.0
      %345 = vmatprep.subr.mxu0 0.0
      %346 = vmatpush1.xpose.msra.mxu0 0.0
      %347 = vmatprep.subr.mxu0 0.0
      %348 = vmatpush1.xpose.msra.mxu0 0.0
      %349 = vmatprep.subr.mxu0 0.0
      %350 = vmatpush1.xpose.msra.mxu0 0.0
      %351 = vmatprep.subr.mxu0 0.0
      %352 = vmatpush1.xpose.msra.mxu0 0.0
      %353 = vmatprep.subr.mxu0 0.0
      %354 = vmatpush1.xpose.msra.mxu0 0.0
      %355 = vmatprep.subr.mxu0 0.0
      %356 = vmatpush1.xpose.msra.mxu0 0.0
      %357 = vmatprep.subr.mxu0 0.0
      %358 = vmatpush1.xpose.msra.mxu0 %v325
      %359 = vmatprep.subr.mxu0 0.0
      %360 = vmatpush2.xpose.msra.mxu0 0.0
      %361 = vmatprep.subr.mxu0 0.0
      %362 = vmatpush2.xpose.msra.mxu0 0.0
      %363 = vmatprep.subr.mxu0 0.0
      %364 = vmatpush2.xpose.msra.mxu0 0.0
      %365 = vmatprep.subr.mxu0 0.0
      %366 = vmatpush2.xpose.msra.mxu0 0.0
      %367 = vmatprep.subr.mxu0 0.0
      %368 = vmatpush2.xpose.msra.mxu0 0.0
      %369 = vmatprep.subr.mxu0 0.0
      %370 = vmatpush2.xpose.msra.mxu0 0.0
      %371 = vmatprep.subr.mxu0 0.0
      %372 = vmatpush2.xpose.msra.mxu0 0.0
      %373 = vmatprep.subr.mxu0 0.0
      %374 = vmatpush2.xpose.msra.mxu0 0.0
      %375 = vmatprep.subr.mxu0 0.0
      %376 = vmatpush2.xpose.msra.mxu0 0.0
      %377 = vmatprep.subr.mxu0 0.0
      %378 = vmatpush2.xpose.msra.mxu0 0.0
      %379 = vmatprep.subr.mxu0 0.0
      %380 = vmatpush2.xpose.msra.mxu0 0.0
      %381 = vmatprep.subr.mxu0 0.0
      %382 = vmatpush2.xpose.msra.mxu0 0.0
      %383 = vmatprep.subr.mxu0 0.0
      %384 = vmatpush2.xpose.msra.mxu0 0.0
      %385 = vmatprep.subr.mxu0 0.0
      %386 = vmatpush2.xpose.msra.mxu0 0.0
      %387 = vmatprep.subr.mxu0 0.0
      %388 = vmatpush2.xpose.msra.mxu0 0.0
      %389 = vmatprep.subr.mxu0 0.0
      %390 = vmatpush2.xpose.msra.mxu0 0.0
      %391 = vmatprep.mubr.f32.mxu0 0.0
      %392 = vmatmul.mubr.f32.gmra.mxu0 %v322
      %v393 = vpop.f32.mrf.mxu0
      %v394 = vadd.f32 0.0, %v393
      %v395 = vpop.f32.mrf.mxu0
      %396 = vdwg.mxu0
      %v397 = vld [vmem:[#allocation2] sm:$0xff]
      %v398 = vsel %vm320, %v394, -inf
      %399 = vmax.xlane.f32.xlu0 %v398
      %v400 = vpop.xlane.xlu0 %399
      %v401 = vmax.f32 %v397, %v400
      %v402 = vsub.f32 %v397, %v401
      %v403 = vmul.f32 %v402, 1.442695
      %v404 = vpow.pop %v403
      %406 = vset.pattern.permute.xlu0 0
      %407 = vperm.xlu0 %406, %v401
      %v408 = vpop.permute.xlu0 %407
      %v410 = vsub.f32 %v394, %v408
      %v411 = vmul.f32 %v410, 1.442695
      %v412 = vpow.pop %v411
      %v413 = vld [vmem:[#allocation3] sm:$0xff]
      %v414 = vmul.f32 %v404, %v413
      %v415 = vsel %vm320, %v412, 0.0
      %416 = vadd.xlane.f32.xlu0 %v415
      %v417 = vpop.xlane.xlu0 %416
      %v418 = vadd.f32 %v414, %v417
      %vm419 = vcmask 7168
      %420 = vst.msk [vmem:[#allocation3] sm:$0xff] %vm419, %v418
      %v421 = vld [vmem:[#allocation4] sm:$0xff]
      %423 = vset.pattern.permute.xlu0 0
      %424 = vperm.xlu0 %423, %v404
      %v425 = vpop.permute.xlu0 %424
      %v427 = vmul.f32 %v425, %v421
      %v429 = vsel %vm320, %v412, 0
      %431 = vmatprep.subr.mxu0 0.0
      %432 = vmatpush1.msra.mxu0 0.0
      %433 = vmatprep.subr.mxu0 0.0
      %434 = vmatpush1.msra.mxu0 0.0
      %435 = vmatprep.subr.mxu0 0.0
      %436 = vmatpush1.msra.mxu0 0.0
      %437 = vmatprep.subr.mxu0 0.0
      %438 = vmatpush1.msra.mxu0 0.0
      %439 = vmatprep.subr.mxu0 0.0
      %440 = vmatpush1.msra.mxu0 0.0
      %441 = vmatprep.subr.mxu0 0.0
      %442 = vmatpush1.msra.mxu0 0.0
      %443 = vmatprep.subr.mxu0 0.0
      %444 = vmatpush1.msra.mxu0 0.0
      %445 = vmatprep.subr.mxu0 0.0
      %446 = vmatpush1.msra.mxu0 0.0
      %447 = vmatprep.subr.mxu0 0.0
      %448 = vmatpush1.msra.mxu0 0.0
      %449 = vmatprep.subr.mxu0 0.0
      %450 = vmatpush1.msra.mxu0 0.0
      %451 = vmatprep.subr.mxu0 0.0
      %452 = vmatpush1.msra.mxu0 0.0
      %453 = vmatprep.subr.mxu0 0.0
      %454 = vmatpush1.msra.mxu0 0.0
      %455 = vmatprep.subr.mxu0 0.0
      %456 = vmatpush1.msra.mxu0 0.0
      %457 = vmatprep.subr.mxu0 0.0
      %458 = vmatpush1.msra.mxu0 0.0
      %459 = vmatprep.subr.mxu0 0.0
      %460 = vmatpush1.msra.mxu0 0.0
      %461 = vmatprep.subr.mxu0 0.0
      %462 = vmatpush1.msra.mxu0 %v319
      %463 = vmatprep.subr.mxu0 0.0
      %464 = vmatpush2.msra.mxu0 0.0
      %465 = vmatprep.subr.mxu0 0.0
      %466 = vmatpush2.msra.mxu0 0.0
      %467 = vmatprep.subr.mxu0 0.0
      %468 = vmatpush2.msra.mxu0 0.0
      %469 = vmatprep.subr.mxu0 0.0
      %470 = vmatpush2.msra.mxu0 0.0
      %471 = vmatprep.subr.mxu0 0.0
      %472 = vmatpush2.msra.mxu0 0.0
      %473 = vmatprep.subr.mxu0 0.0
      %474 = vmatpush2.msra.mxu0 0.0
      %475 = vmatprep.subr.mxu0 0.0
      %476 = vmatpush2.msra.mxu0 0.0
      %477 = vmatprep.subr.mxu0 0.0
      %478 = vmatpush2.msra.mxu0 0.0
      %479 = vmatprep.subr.mxu0 0.0
      %480 = vmatpush2.msra.mxu0 0.0
      %481 = vmatprep.subr.mxu0 0.0
      %482 = vmatpush2.msra.mxu0 0.0
      %483 = vmatprep.subr.mxu0 0.0
      %484 = vmatpush2.msra.mxu0 0.0
      %485 = vmatprep.subr.mxu0 0.0
      %486 = vmatpush2.msra.mxu0 0.0
      %487 = vmatprep.subr.mxu0 0.0
      %488 = vmatpush2.msra.mxu0 0.0
      %489 = vmatprep.subr.mxu0 0.0
      %490 = vmatpush2.msra.mxu0 0.0
      %491 = vmatprep.subr.mxu0 0.0
      %492 = vmatpush2.msra.mxu0 0.0
      %493 = vmatprep.subr.mxu0 0.0
      %494 = vmatpush2.msra.mxu0 0.0
      %495 = vmatprep.mubr.f32.mxu0 0.0
      %496 = vmatmul.mubr.f32.gmra.mxu0 %v429
      %v497 = vpop.f32.mrf.mxu0
      %v498 = vadd.f32 0.0, %v497
      %v499 = vpop.f32.mrf.mxu0
      %500 = vdwg.mxu0
      %v501 = vadd.f32 %v427, %v498
      %502 = vst.msk [vmem:[#allocation4] sm:$0xff] %vm320, %v501
      %503 = vst.msk [vmem:[#allocation2] sm:$0xff] %vm419, %v401
      %504 = vrot.lane.b32.xlu0 %v317, 120
      %v505 = vpop.permute.xlu0 %504
      %506 = vrot.lane.b32.xlu0 %v318, 120
      %v507 = vpop.permute.xlu0 %506
      %v508 = vsel %vm320, %v505, 0
      %v510 = vsel %vm320, %v507, 0
      %512 = vmatprep.subr.mxu0 0.0
      %513 = vmatpush1.xpose.msra.mxu0 0.0
      %514 = vmatprep.subr.mxu0 0.0
      %515 = vmatpush1.xpose.msra.mxu0 0.0
      %516 = vmatprep.subr.mxu0 0.0
      %517 = vmatpush1.xpose.msra.mxu0 0.0
      %518 = vmatprep.subr.mxu0 0.0
      %519 = vmatpush1.xpose.msra.mxu0 0.0
      %520 = vmatprep.subr.mxu0 0.0
      %521 = vmatpush1.xpose.msra.mxu0 0.0
      %522 = vmatprep.subr.mxu0 0.0
      %523 = vmatpush1.xpose.msra.mxu0 0.0
      %524 = vmatprep.subr.mxu0 0.0
      %525 = vmatpush1.xpose.msra.mxu0 0.0
      %526 = vmatprep.subr.mxu0 0.0
      %527 = vmatpush1.xpose.msra.mxu0 0.0
      %528 = vmatprep.subr.mxu0 0.0
      %529 = vmatpush1.xpose.msra.mxu0 0.0
      %530 = vmatprep.subr.mxu0 0.0
      %531 = vmatpush1.xpose.msra.mxu0 0.0
      %532 = vmatprep.subr.mxu0 0.0
      %533 = vmatpush1.xpose.msra.mxu0 0.0
      %534 = vmatprep.subr.mxu0 0.0
      %535 = vmatpush1.xpose.msra.mxu0 0.0
      %536 = vmatprep.subr.mxu0 0.0
      %537 = vmatpush1.xpose.msra.mxu0 0.0
      %538 = vmatprep.subr.mxu0 0.0
      %539 = vmatpush1.xpose.msra.mxu0 0.0
      %540 = vmatprep.subr.mxu0 0.0
      %541 = vmatpush1.xpose.msra.mxu0 0.0
      %542 = vmatprep.subr.mxu0 0.0
      %543 = vmatpush1.xpose.msra.mxu0 %v510
      %544 = vmatprep.subr.mxu0 0.0
      %545 = vmatpush2.xpose.msra.mxu0 0.0
      %546 = vmatprep.subr.mxu0 0.0
      %547 = vmatpush2.xpose.msra.mxu0 0.0
      %548 = vmatprep.subr.mxu0 0.0
      %549 = vmatpush2.xpose.msra.mxu0 0.0
      %550 = vmatprep.subr.mxu0 0.0
      %551 = vmatpush2.xpose.msra.mxu0 0.0
      %552 = vmatprep.subr.mxu0 0.0
      %553 = vmatpush2.xpose.msra.mxu0 0.0
      %554 = vmatprep.subr.mxu0 0.0
      %555 = vmatpush2.xpose.msra.mxu0 0.0
      %556 = vmatprep.subr.mxu0 0.0
      %557 = vmatpush2.xpose.msra.mxu0 0.0
      %558 = vmatprep.subr.mxu0 0.0
      %559 = vmatpush2.xpose.msra.mxu0 0.0
      %560 = vmatprep.subr.mxu0 0.0
      %561 = vmatpush2.xpose.msra.mxu0 0.0
      %562 = vmatprep.subr.mxu0 0.0
      %563 = vmatpush2.xpose.msra.mxu0 0.0
      %564 = vmatprep.subr.mxu0 0.0
      %565 = vmatpush2.xpose.msra.mxu0 0.0
      %566 = vmatprep.subr.mxu0 0.0
      %567 = vmatpush2.xpose.msra.mxu0 0.0
      %568 = vmatprep.subr.mxu0 0.0
      %569 = vmatpush2.xpose.msra.mxu0 0.0
      %570 = vmatprep.subr.mxu0 0.0
      %571 = vmatpush2.xpose.msra.mxu0 0.0
      %572 = vmatprep.subr.mxu0 0.0
      %573 = vmatpush2.xpose.msra.mxu0 0.0
      %574 = vmatprep.subr.mxu0 0.0
      %575 = vmatpush2.xpose.msra.mxu0 0.0
      %576 = vmatprep.mubr.f32.mxu0 0.0
      %577 = vmatmul.mubr.f32.gmra.mxu0 %v508
      %v578 = vpop.f32.mrf.mxu0
      %v579 = vadd.f32 0.0, %v578
      %v580 = vpop.f32.mrf.mxu0
      %581 = vdwg.mxu0
      %v582 = vld [vmem:[#allocation2] sm:$0xff]
      %v583 = vsel %vm320, %v579, -inf
      %584 = vmax.xlane.f32.xlu0 %v583
      %v585 = vpop.xlane.xlu0 %584
      %v586 = vmax.f32 %v582, %v585
      %v587 = vsub.f32 %v582, %v586
      %v588 = vmul.f32 %v587, 1.442695
      %v589 = vpow.pop %v588
      %591 = vset.pattern.permute.xlu0 1
      %592 = vperm.xlu0 %591, %v586
      %v593 = vpop.permute.xlu0 %592
      %v595 = vsub.f32 %v579, %v593
      %v596 = vmul.f32 %v595, 1.442695
      %v597 = vpow.pop %v596
      %v598 = vld [vmem:[#allocation3] sm:$0xff]
      %v599 = vmul.f32 %v589, %v598
      %v600 = vsel %vm320, %v597, 0.0
      %601 = vadd.xlane.f32.xlu0 %v600
      %v602 = vpop.xlane.xlu0 %601
      %v603 = vadd.f32 %v599, %v602
      %vm604 = vcmask 15368
      %605 = vst.msk [vmem:[#allocation3] sm:$0xff] %vm604, %v603
      %v606 = vld [vmem:[#allocation4] sm:$0xff]
      %608 = vset.pattern.permute.xlu0 1
      %609 = vperm.xlu0 %608, %v589
      %v610 = vpop.permute.xlu0 %609
      %v612 = vmul.f32 %v610, %v606
      %614 = vrot.lane.b32.xlu0 %v319, 120
      %v615 = vpop.permute.xlu0 %614
      %v618 = vsel %vm320, %v597, 0
      %620 = vmatprep.subr.mxu0 0.0
      %621 = vmatpush1.msra.mxu0 0.0
      %622 = vmatprep.subr.mxu0 0.0
      %623 = vmatpush1.msra.mxu0 0.0
      %624 = vmatprep.subr.mxu0 0.0
      %625 = vmatpush1.msra.mxu0 0.0
      %626 = vmatprep.subr.mxu0 0.0
      %627 = vmatpush1.msra.mxu0 0.0
      %628 = vmatprep.subr.mxu0 0.0
      %629 = vmatpush1.msra.mxu0 0.0
      %630 = vmatprep.subr.mxu0 0.0
      %631 = vmatpush1.msra.mxu0 0.0
      %632 = vmatprep.subr.mxu0 0.0
      %633 = vmatpush1.msra.mxu0 0.0
      %634 = vmatprep.subr.mxu0 0.0
      %635 = vmatpush1.msra.mxu0 0.0
      %636 = vmatprep.subr.mxu0 0.0
      %637 = vmatpush1.msra.mxu0 0.0
      %638 = vmatprep.subr.mxu0 0.0
      %639 = vmatpush1.msra.mxu0 0.0
      %640 = vmatprep.subr.mxu0 0.0
      %641 = vmatpush1.msra.mxu0 0.0
      %642 = vmatprep.subr.mxu0 0.0
      %643 = vmatpush1.msra.mxu0 0.0
      %644 = vmatprep.subr.mxu0 0.0
      %645 = vmatpush1.msra.mxu0 0.0
      %646 = vmatprep.subr.mxu0 0.0
      %647 = vmatpush1.msra.mxu0 0.0
      %648 = vmatprep.subr.mxu0 0.0
      %649 = vmatpush1.msra.mxu0 0.0
      %650 = vmatprep.subr.mxu0 0.0
      %651 = vmatpush1.msra.mxu0 %v615
      %652 = vmatprep.subr.mxu0 0.0
      %653 = vmatpush2.msra.mxu0 0.0
      %654 = vmatprep.subr.mxu0 0.0
      %655 = vmatpush2.msra.mxu0 0.0
      %656 = vmatprep.subr.mxu0 0.0
      %657 = vmatpush2.msra.mxu0 0.0
      %658 = vmatprep.subr.mxu0 0.0
      %659 = vmatpush2.msra.mxu0 0.0
      %660 = vmatprep.subr.mxu0 0.0
      %661 = vmatpush2.msra.mxu0 0.0
      %662 = vmatprep.subr.mxu0 0.0
      %663 = vmatpush2.msra.mxu0 0.0
      %664 = vmatprep.subr.mxu0 0.0
      %665 = vmatpush2.msra.mxu0 0.0
      %666 = vmatprep.subr.mxu0 0.0
      %667 = vmatpush2.msra.mxu0 0.0
      %668 = vmatprep.subr.mxu0 0.0
      %669 = vmatpush2.msra.mxu0 0.0
      %670 = vmatprep.subr.mxu0 0.0
      %671 = vmatpush2.msra.mxu0 0.0
      %672 = vmatprep.subr.mxu0 0.0
      %673 = vmatpush2.msra.mxu0 0.0
      %674 = vmatprep.subr.mxu0 0.0
      %675 = vmatpush2.msra.mxu0 0.0
      %676 = vmatprep.subr.mxu0 0.0
      %677 = vmatpush2.msra.mxu0 0.0
      %678 = vmatprep.subr.mxu0 0.0
      %679 = vmatpush2.msra.mxu0 0.0
      %680 = vmatprep.subr.mxu0 0.0
      %681 = vmatpush2.msra.mxu0 0.0
      %682 = vmatprep.subr.mxu0 0.0
      %683 = vmatpush2.msra.mxu0 0.0
      %684 = vmatprep.mubr.f32.mxu0 0.0
      %685 = vmatmul.mubr.f32.gmra.mxu0 %v618
      %v686 = vpop.f32.mrf.mxu0
      %v687 = vadd.f32 0.0, %v686
      %v688 = vpop.f32.mrf.mxu0
      %689 = vdwg.mxu0
      %691 = vrot.lane.b32.xlu0 %v687, 8
      %v692 = vpop.permute.xlu0 %691
      %v694 = vadd.f32 %v612, %v692
      %vm695 = vcmask 130112
      %696 = vst.msk [vmem:[#allocation4] sm:$0xff] %vm695, %v694
      %697 = vst.msk [vmem:[#allocation2] sm:$0xff] %vm604, %v586
      %698 = vrot.lane.b32.xlu0 %v317, 112
      %v699 = vpop.permute.xlu0 %698
      %700 = vrot.lane.b32.xlu0 %v318, 112
      %v701 = vpop.permute.xlu0 %700
      %v702 = vsel %vm320, %v699, 0
      %v704 = vsel %vm320, %v701, 0
      %706 = vmatprep.subr.mxu0 0.0
      %707 = vmatpush1.xpose.msra.mxu0 0.0
      %708 = vmatprep.subr.mxu0 0.0
      %709 = vmatpush1.xpose.msra.mxu0 0.0
      %710 = vmatprep.subr.mxu0 0.0
      %711 = vmatpush1.xpose.msra.mxu0 0.0
      %712 = vmatprep.subr.mxu0 0.0
      %713 = vmatpush1.xpose.msra.mxu0 0.0
      %714 = vmatprep.subr.mxu0 0.0
      %715 = vmatpush1.xpose.msra.mxu0 0.0
      %716 = vmatprep.subr.mxu0 0.0
      %717 = vmatpush1.xpose.msra.mxu0 0.0
      %718 = vmatprep.subr.mxu0 0.0
      %719 = vmatpush1.xpose.msra.mxu0 0.0
      %720 = vmatprep.subr.mxu0 0.0
      %721 = vmatpush1.xpose.msra.mxu0 0.0
      %722 = vmatprep.subr.mxu0 0.0
      %723 = vmatpush1.xpose.msra.mxu0 0.0
      %724 = vmatprep.subr.mxu0 0.0
      %725 = vmatpush1.xpose.msra.mxu0 0.0
      %726 = vmatprep.subr.mxu0 0.0
      %727 = vmatpush1.xpose.msra.mxu0 0.0
      %728 = vmatprep.subr.mxu0 0.0
      %729 = vmatpush1.xpose.msra.mxu0 0.0
      %730 = vmatprep.subr.mxu0 0.0
      %731 = vmatpush1.xpose.msra.mxu0 0.0
      %732 = vmatprep.subr.mxu0 0.0
      %733 = vmatpush1.xpose.msra.mxu0 0.0
      %734 = vmatprep.subr.mxu0 0.0
      %735 = vmatpush1.xpose.msra.mxu0 0.0
      %736 = vmatprep.subr.mxu0 0.0
      %737 = vmatpush1.xpose.msra.mxu0 %v704
      %738 = vmatprep.subr.mxu0 0.0
      %739 = vmatpush2.xpose.msra.mxu0 0.0
      %740 = vmatprep.subr.mxu0 0.0
      %741 = vmatpush2.xpose.msra.mxu0 0.0
      %742 = vmatprep.subr.mxu0 0.0
      %743 = vmatpush2.xpose.msra.mxu0 0.0
      %744 = vmatprep.subr.mxu0 0.0
      %745 = vmatpush2.xpose.msra.mxu0 0.0
      %746 = vmatprep.subr.mxu0 0.0
      %747 = vmatpush2.xpose.msra.mxu0 0.0
      %748 = vmatprep.subr.mxu0 0.0
      %749 = vmatpush2.xpose.msra.mxu0 0.0
      %750 = vmatprep.subr.mxu0 0.0
      %751 = vmatpush2.xpose.msra.mxu0 0.0
      %752 = vmatprep.subr.mxu0 0.0
      %753 = vmatpush2.xpose.msra.mxu0 0.0
      %754 = vmatprep.subr.mxu0 0.0
      %755 = vmatpush2.xpose.msra.mxu0 0.0
      %756 = vmatprep.subr.mxu0 0.0
      %757 = vmatpush2.xpose.msra.mxu0 0.0
      %758 = vmatprep.subr.mxu0 0.0
      %759 = vmatpush2.xpose.msra.mxu0 0.0
      %760 = vmatprep.subr.mxu0 0.0
      %761 = vmatpush2.xpose.msra.mxu0 0.0
      %762 = vmatprep.subr.mxu0 0.0
      %763 = vmatpush2.xpose.msra.mxu0 0.0
      %764 = vmatprep.subr.mxu0 0.0
      %765 = vmatpush2.xpose.msra.mxu0 0.0
      %766 = vmatprep.subr.mxu0 0.0
      %767 = vmatpush2.xpose.msra.mxu0 0.0
      %768 = vmatprep.subr.mxu0 0.0
      %769 = vmatpush2.xpose.msra.mxu0 0.0
      %770 = vmatprep.mubr.f32.mxu0 0.0
      %771 = vmatmul.mubr.f32.gmra.mxu0 %v702
      %v772 = vpop.f32.mrf.mxu0
      %v773 = vadd.f32 0.0, %v772
      %v774 = vpop.f32.mrf.mxu0
      %775 = vdwg.mxu0
      %v776 = vld [vmem:[#allocation2] sm:$0xff]
      %v777 = vsel %vm320, %v773, -inf
      %778 = vmax.xlane.f32.xlu0 %v777
      %v779 = vpop.xlane.xlu0 %778
      %v780 = vmax.f32 %v776, %v779
      %v781 = vsub.f32 %v776, %v780
      %v782 = vmul.f32 %v781, 1.442695
      %v783 = vpow.pop %v782
      %785 = vset.pattern.permute.xlu0 2
      %786 = vperm.xlu0 %785, %v780
      %v787 = vpop.permute.xlu0 %786
      %v789 = vsub.f32 %v773, %v787
      %v790 = vmul.f32 %v789, 1.442695
      %v791 = vpow.pop %v790
      %v792 = vld [vmem:[#allocation3] sm:$0xff]
      %v793 = vmul.f32 %v783, %v792
      %v794 = vsel %vm320, %v791, 0.0
      %795 = vadd.xlane.f32.xlu0 %v794
      %v796 = vpop.xlane.xlu0 %795
      %v797 = vadd.f32 %v793, %v796
      %vm798 = vcmask 23568
      %799 = vst.msk [vmem:[#allocation3] sm:$0xff] %vm798, %v797
      %v800 = vld [vmem:[#allocation4] sm:$0xff]
      %802 = vset.pattern.permute.xlu0 2
      %803 = vperm.xlu0 %802, %v783
      %v804 = vpop.permute.xlu0 %803
      %v806 = vmul.f32 %v804, %v800
      %807 = vrot.lane.b32.xlu0 %v319, 112
      %v808 = vpop.permute.xlu0 %807
      %v811 = vsel %vm320, %v791, 0
      %813 = vmatprep.subr.mxu0 0.0
      %814 = vmatpush1.msra.mxu0 0.0
      %815 = vmatprep.subr.mxu0 0.0
      %816 = vmatpush1.msra.mxu0 0.0
      %817 = vmatprep.subr.mxu0 0.0
      %818 = vmatpush1.msra.mxu0 0.0
      %819 = vmatprep.subr.mxu0 0.0
      %820 = vmatpush1.msra.mxu0 0.0
      %821 = vmatprep.subr.mxu0 0.0
      %822 = vmatpush1.msra.mxu0 0.0
      %823 = vmatprep.subr.mxu0 0.0
      %824 = vmatpush1.msra.mxu0 0.0
      %825 = vmatprep.subr.mxu0 0.0
      %826 = vmatpush1.msra.mxu0 0.0
      %827 = vmatprep.subr.mxu0 0.0
      %828 = vmatpush1.msra.mxu0 0.0
      %829 = vmatprep.subr.mxu0 0.0
      %830 = vmatpush1.msra.mxu0 0.0
      %831 = vmatprep.subr.mxu0 0.0
      %832 = vmatpush1.msra.mxu0 0.0
      %833 = vmatprep.subr.mxu0 0.0
      %834 = vmatpush1.msra.mxu0 0.0
      %835 = vmatprep.subr.mxu0 0.0
      %836 = vmatpush1.msra.mxu0 0.0
      %837 = vmatprep.subr.mxu0 0.0
      %838 = vmatpush1.msra.mxu0 0.0
      %839 = vmatprep.subr.mxu0 0.0
      %840 = vmatpush1.msra.mxu0 0.0
      %841 = vmatprep.subr.mxu0 0.0
      %842 = vmatpush1.msra.mxu0 0.0
      %843 = vmatprep.subr.mxu0 0.0
      %844 = vmatpush1.msra.mxu0 %v808
      %845 = vmatprep.subr.mxu0 0.0
      %846 = vmatpush2.msra.mxu0 0.0
      %847 = vmatprep.subr.mxu0 0.0
      %848 = vmatpush2.msra.mxu0 0.0
      %849 = vmatprep.subr.mxu0 0.0
      %850 = vmatpush2.msra.mxu0 0.0
      %851 = vmatprep.subr.mxu0 0.0
      %852 = vmatpush2.msra.mxu0 0.0
      %853 = vmatprep.subr.mxu0 0.0
      %854 = vmatpush2.msra.mxu0 0.0
      %855 = vmatprep.subr.mxu0 0.0
      %856 = vmatpush2.msra.mxu0 0.0
      %857 = vmatprep.subr.mxu0 0.0
      %858 = vmatpush2.msra.mxu0 0.0
      %859 = vmatprep.subr.mxu0 0.0
      %860 = vmatpush2.msra.mxu0 0.0
      %861 = vmatprep.subr.mxu0 0.0
      %862 = vmatpush2.msra.mxu0 0.0
      %863 = vmatprep.subr.mxu0 0.0
      %864 = vmatpush2.msra.mxu0 0.0
      %865 = vmatprep.subr.mxu0 0.0
      %866 = vmatpush2.msra.mxu0 0.0
      %867 = vmatprep.subr.mxu0 0.0
      %868 = vmatpush2.msra.mxu0 0.0
      %869 = vmatprep.subr.mxu0 0.0
      %870 = vmatpush2.msra.mxu0 0.0
      %871 = vmatprep.subr.mxu0 0.0
      %872 = vmatpush2.msra.mxu0 0.0
      %873 = vmatprep.subr.mxu0 0.0
      %874 = vmatpush2.msra.mxu0 0.0
      %875 = vmatprep.subr.mxu0 0.0
      %876 = vmatpush2.msra.mxu0 0.0
      %877 = vmatprep.mubr.f32.mxu0 0.0
      %878 = vmatmul.mubr.f32.gmra.mxu0 %v811
      %v879 = vpop.f32.mrf.mxu0
      %v880 = vadd.f32 0.0, %v879
      %v881 = vpop.f32.mrf.mxu0
      %882 = vdwg.mxu0
      %884 = vrot.lane.b32.xlu0 %v880, 16
      %v885 = vpop.permute.xlu0 %884
      %v887 = vadd.f32 %v806, %v885
      %vm888 = vcmask 195712
      %889 = vst.msk [vmem:[#allocation4] sm:$0xff] %vm888, %v887
      %890 = vst.msk [vmem:[#allocation2] sm:$0xff] %vm798, %v780
      %891 = vrot.lane.b32.xlu0 %v317, 104
      %v892 = vpop.permute.xlu0 %891
      %893 = vrot.lane.b32.xlu0 %v318, 104
      %v894 = vpop.permute.xlu0 %893
      %v895 = vsel %vm320, %v892, 0
      %v897 = vsel %vm320, %v894, 0
      %899 = vmatprep.subr.mxu0 0.0
      %900 = vmatpush1.xpose.msra.mxu0 0.0
      %901 = vmatprep.subr.mxu0 0.0
      %902 = vmatpush1.xpose.msra.mxu0 0.0
      %903 = vmatprep.subr.mxu0 0.0
      %904 = vmatpush1.xpose.msra.mxu0 0.0
      %905 = vmatprep.subr.mxu0 0.0
      %906 = vmatpush1.xpose.msra.mxu0 0.0
      %907 = vmatprep.subr.mxu0 0.0
      %908 = vmatpush1.xpose.msra.mxu0 0.0
      %909 = vmatprep.subr.mxu0 0.0
      %910 = vmatpush1.xpose.msra.mxu0 0.0
      %911 = vmatprep.subr.mxu0 0.0
      %912 = vmatpush1.xpose.msra.mxu0 0.0
      %913 = vmatprep.subr.mxu0 0.0
      %914 = vmatpush1.xpose.msra.mxu0 0.0
      %915 = vmatprep.subr.mxu0 0.0
      %916 = vmatpush1.xpose.msra.mxu0 0.0
      %917 = vmatprep.subr.mxu0 0.0
      %918 = vmatpush1.xpose.msra.mxu0 0.0
      %919 = vmatprep.subr.mxu0 0.0
      %920 = vmatpush1.xpose.msra.mxu0 0.0
      %921 = vmatprep.subr.mxu0 0.0
      %922 = vmatpush1.xpose.msra.mxu0 0.0
      %923 = vmatprep.subr.mxu0 0.0
      %924 = vmatpush1.xpose.msra.mxu0 0.0
      %925 = vmatprep.subr.mxu0 0.0
      %926 = vmatpush1.xpose.msra.mxu0 0.0
      %927 = vmatprep.subr.mxu0 0.0
      %928 = vmatpush1.xpose.msra.mxu0 0.0
      %929 = vmatprep.subr.mxu0 0.0
      %930 = vmatpush1.xpose.msra.mxu0 %v897
      %931 = vmatprep.subr.mxu0 0.0
      %932 = vmatpush2.xpose.msra.mxu0 0.0
      %933 = vmatprep.subr.mxu0 0.0
      %934 = vmatpush2.xpose.msra.mxu0 0.0
      %935 = vmatprep.subr.mxu0 0.0
      %936 = vmatpush2.xpose.msra.mxu0 0.0
      %937 = vmatprep.subr.mxu0 0.0
      %938 = vmatpush2.xpose.msra.mxu0 0.0
      %939 = vmatprep.subr.mxu0 0.0
      %940 = vmatpush2.xpose.msra.mxu0 0.0
      %941 = vmatprep.subr.mxu0 0.0
      %942 = vmatpush2.xpose.msra.mxu0 0.0
      %943 = vmatprep.subr.mxu0 0.0
      %944 = vmatpush2.xpose.msra.mxu0 0.0
      %945 = vmatprep.subr.mxu0 0.0
      %946 = vmatpush2.xpose.msra.mxu0 0.0
      %947 = vmatprep.subr.mxu0 0.0
      %948 = vmatpush2.xpose.msra.mxu0 0.0
      %949 = vmatprep.subr.mxu0 0.0
      %950 = vmatpush2.xpose.msra.mxu0 0.0
      %951 = vmatprep.subr.mxu0 0.0
      %952 = vmatpush2.xpose.msra.mxu0 0.0
      %953 = vmatprep.subr.mxu0 0.0
      %954 = vmatpush2.xpose.msra.mxu0 0.0
      %955 = vmatprep.subr.mxu0 0.0
      %956 = vmatpush2.xpose.msra.mxu0 0.0
      %957 = vmatprep.subr.mxu0 0.0
      %958 = vmatpush2.xpose.msra.mxu0 0.0
      %959 = vmatprep.subr.mxu0 0.0
      %960 = vmatpush2.xpose.msra.mxu0 0.0
      %961 = vmatprep.subr.mxu0 0.0
      %962 = vmatpush2.xpose.msra.mxu0 0.0
      %963 = vmatprep.mubr.f32.mxu0 0.0
      %964 = vmatmul.mubr.f32.gmra.mxu0 %v895
      %v965 = vpop.f32.mrf.mxu0
      %v966 = vadd.f32 0.0, %v965
      %v967 = vpop.f32.mrf.mxu0
      %968 = vdwg.mxu0
      %v969 = vld [vmem:[#allocation2] sm:$0xff]
      %v970 = vsel %vm320, %v966, -inf
      %971 = vmax.xlane.f32.xlu0 %v970
      %v972 = vpop.xlane.xlu0 %971
      %v973 = vmax.f32 %v969, %v972
      %v974 = vsub.f32 %v969, %v973
      %v975 = vmul.f32 %v974, 1.442695
      %v976 = vpow.pop %v975
      %978 = vset.pattern.permute.xlu0 3
      %979 = vperm.xlu0 %978, %v973
      %v980 = vpop.permute.xlu0 %979
      %v982 = vsub.f32 %v966, %v980
      %v983 = vmul.f32 %v982, 1.442695
      %v984 = vpow.pop %v983
      %v985 = vld [vmem:[#allocation3] sm:$0xff]
      %v986 = vmul.f32 %v976, %v985
      %v987 = vsel %vm320, %v984, 0.0
      %988 = vadd.xlane.f32.xlu0 %v987
      %v989 = vpop.xlane.xlu0 %988
      %v990 = vadd.f32 %v986, %v989
      %vm991 = vcmask 31768
      %992 = vst.msk [vmem:[#allocation3] sm:$0xff] %vm991, %v990
      %v993 = vld [vmem:[#allocation4] sm:$0xff]
      %995 = vset.pattern.permute.xlu0 3
      %996 = vperm.xlu0 %995, %v976
      %v997 = vpop.permute.xlu0 %996
      %v999 = vmul.f32 %v997, %v993
      %1000 = vrot.lane.b32.xlu0 %v319, 104
      %v1001 = vpop.permute.xlu0 %1000
      %v1004 = vsel %vm320, %v984, 0
      %1006 = vmatprep.subr.mxu0 0.0
      %1007 = vmatpush1.msra.mxu0 0.0
      %1008 = vmatprep.subr.mxu0 0.0
      %1009 = vmatpush1.msra.mxu0 0.0
      %1010 = vmatprep.subr.mxu0 0.0
      %1011 = vmatpush1.msra.mxu0 0.0
      %1012 = vmatprep.subr.mxu0 0.0
      %1013 = vmatpush1.msra.mxu0 0.0
      %1014 = vmatprep.subr.mxu0 0.0
      %1015 = vmatpush1.msra.mxu0 0.0
      %1016 = vmatprep.subr.mxu0 0.0
      %1017 = vmatpush1.msra.mxu0 0.0
      %1018 = vmatprep.subr.mxu0 0.0
      %1019 = vmatpush1.msra.mxu0 0.0
      %1020 = vmatprep.subr.mxu0 0.0
      %1021 = vmatpush1.msra.mxu0 0.0
      %1022 = vmatprep.subr.mxu0 0.0
      %1023 = vmatpush1.msra.mxu0 0.0
      %1024 = vmatprep.subr.mxu0 0.0
      %1025 = vmatpush1.msra.mxu0 0.0
      %1026 = vmatprep.subr.mxu0 0.0
      %1027 = vmatpush1.msra.mxu0 0.0
      %1028 = vmatprep.subr.mxu0 0.0
      %1029 = vmatpush1.msra.mxu0 0.0
      %1030 = vmatprep.subr.mxu0 0.0
      %1031 = vmatpush1.msra.mxu0 0.0
      %1032 = vmatprep.subr.mxu0 0.0
      %1033 = vmatpush1.msra.mxu0 0.0
      %1034 = vmatprep.subr.mxu0 0.0
      %1035 = vmatpush1.msra.mxu0 0.0
      %1036 = vmatprep.subr.mxu0 0.0
      %1037 = vmatpush1.msra.mxu0 %v1001
      %1038 = vmatprep.subr.mxu0 0.0
      %1039 = vmatpush2.msra.mxu0 0.0
      %1040 = vmatprep.subr.mxu0 0.0
      %1041 = vmatpush2.msra.mxu0 0.0
      %1042 = vmatprep.subr.mxu0 0.0
      %1043 = vmatpush2.msra.mxu0 0.0
      %1044 = vmatprep.subr.mxu0 0.0
      %1045 = vmatpush2.msra.mxu0 0.0
      %1046 = vmatprep.subr.mxu0 0.0
      %1047 = vmatpush2.msra.mxu0 0.0
      %1048 = vmatprep.subr.mxu0 0.0
      %1049 = vmatpush2.msra.mxu0 0.0
      %1050 = vmatprep.subr.mxu0 0.0
      %1051 = vmatpush2.msra.mxu0 0.0
      %1052 = vmatprep.subr.mxu0 0.0
      %1053 = vmatpush2.msra.mxu0 0.0
      %1054 = vmatprep.subr.mxu0 0.0
      %1055 = vmatpush2.msra.mxu0 0.0
      %1056 = vmatprep.subr.mxu0 0.0
      %1057 = vmatpush2.msra.mxu0 0.0
      %1058 = vmatprep.subr.mxu0 0.0
      %1059 = vmatpush2.msra.mxu0 0.0
      %1060 = vmatprep.subr.mxu0 0.0
      %1061 = vmatpush2.msra.mxu0 0.0
      %1062 = vmatprep.subr.mxu0 0.0
      %1063 = vmatpush2.msra.mxu0 0.0
      %1064 = vmatprep.subr.mxu0 0.0
      %1065 = vmatpush2.msra.mxu0 0.0
      %1066 = vmatprep.subr.mxu0 0.0
      %1067 = vmatpush2.msra.mxu0 0.0
      %1068 = vmatprep.subr.mxu0 0.0
      %1069 = vmatpush2.msra.mxu0 0.0
      %1070 = vmatprep.mubr.f32.mxu0 0.0
      %1071 = vmatmul.mubr.f32.gmra.mxu0 %v1004
      %v1072 = vpop.f32.mrf.mxu0
      %v1073 = vadd.f32 0.0, %v1072
      %v1074 = vpop.f32.mrf.mxu0
      %1075 = vdwg.mxu0
      %1077 = vrot.lane.b32.xlu0 %v1073, 24
      %v1078 = vpop.permute.xlu0 %1077
      %v1080 = vadd.f32 %v999, %v1078
      %vm1081 = vcmask 261312
      %1082 = vst.msk [vmem:[#allocation4] sm:$0xff] %vm1081, %v1080
      %1083 = vst.msk [vmem:[#allocation2] sm:$0xff] %vm991, %v973
      // Predicated region
      $region37: #{vivit_attention.4} parent=31 // pred_check
        %p1084 = pneg %p308
      $region38: #{vivit_attention.4} parent=31 // pred_check_branch
        %1086 = sbr.rel (%p1084) target = $region40
      $region39: #{vivit_attention.4} parent=31 // pred_region
        %v1087 = vld [vmem:[#allocation4] sm:$0xff]
        %v1088 = vld [vmem:[#allocation3] sm:$0xff]
        %1090 = vset.pattern.permute.xlu0 0
        %1091 = vperm.xlu0 %1090, %v1088
        %v1092 = vpop.permute.xlu0 %1091
        %v1094 = vrcp.pop %v1092
        %v1095 = vmul.f32 %v1087, %v1094
        %1096 = vset.pattern.permute.xlu0 1
        %1097 = vperm.xlu0 %1096, %v1088
        %v1098 = vpop.permute.xlu0 %1097
        %v1100 = vrcp.pop %v1098
        %v1101 = vmul.f32 %v1087, %v1100
        %1102 = vset.pattern.permute.xlu0 2
        %1103 = vperm.xlu0 %1102, %v1088
        %v1104 = vpop.permute.xlu0 %1103
        %v1106 = vrcp.pop %v1104
        %v1107 = vmul.f32 %v1087, %v1106
        %1108 = vset.pattern.permute.xlu0 3
        %1109 = vperm.xlu0 %1108, %v1088
        %v1110 = vpop.permute.xlu0 %1109
        %v1112 = vrcp.pop %v1110
        %v1113 = vmul.f32 %v1087, %v1112
        %v1114 = vsel %vm320, %v1095, %v1101
        %vm1115 = vcmask 130048
        %v1116 = vsel %vm1115, %v1114, %v1107
        %vm1117 = vcmask 195584
        %v1118 = vsel %vm1117, %v1116, %v1113
        %vm1119 = vcmask 261120
        %1120 = vst.msk [vmem:[%s307] sm:$0xff] %vm1119, %v1118
      $region40: #{vivit_attention.4} parent=31 // pred_fallthru
        _
      %p1121 = scmp.lt.s32.totalorder %s20, 1
      %s1122 = scalar_select %p1121, %s20, 1
      %p1123 = scmp.lt.s32.totalorder %s22, 0
      %s1124 = scalar_select %p1123, %s22, 0
      %p1125 = scmp.lt.s32.totalorder %s21, 0
      %s1126 = scalar_select %p1125, %s21, 0
      %s1127 = sadd.s32 %s1126, %s1124
      %s1128 = sadd.s32 %s1127, %s1122
      %s1129 = smul.addr %s1128, 8
      %s1130 = scalar_lea.vmem %s3, %s1129
      // Predicated region
      $region41: #{vivit_attention.4} parent=31 // pred_check
        %p1131 = pneg %p152
      $region42: #{vivit_attention.4} parent=31 // pred_check_branch
        %1133 = sbr.rel (%p1131) target = $region44
      $region43: #{vivit_attention.4} parent=31 // pred_region
        _
      $region44: #{vivit_attention.4} parent=31 // pred_fallthru
        _
    $region32: #{vivit_attention.4} parent=5 // pred_fallthru
      _
    %p1134 = scmp.le.s32.totalorder 2, %s9
    // Predicated region
    $region45: #{vivit_attention.4} parent=5 // pred_check
      %p1135 = pneg %p1134
    $region46: #{vivit_attention.4} parent=5 // pred_check_branch
      %1137 = sbr.rel (%p1135) target = $region48
    $region47: #{vivit_attention.4} parent=5 // pred_region
      %s1138 = ssub.s32 %s9, 2
      // Predicated region
      $region49: #{vivit_attention.4} parent=47 // pred_check
        %p1139 = pneg %p158
      $region50: #{vivit_attention.4} parent=47 // pred_check_branch
        %1141 = sbr.rel (%p1139) target = $region52
      $region51: #{vivit_attention.4} parent=47 // pred_region
        %p1142 = scmp.lt.s32.totalorder %s24, 1
        %s1143 = scalar_select %p1142, %s24, 1
        %p1144 = scmp.lt.s32.totalorder %s26, 0
        %s1145 = scalar_select %p1144, %s26, 0
        %p1146 = scmp.lt.s32.totalorder %s25, 0
        %s1147 = scalar_select %p1146, %s25, 0
        %s1148 = sadd.s32 %s1147, %s1145
        %s1149 = sadd.s32 %s1148, %s1143
        %s1150 = smul.addr %s1149, 8
        %s1151 = scalar_lea.vmem %s3, %s1150
      $region52: #{vivit_attention.4} parent=47 // pred_fallthru
        _
    $region48: #{vivit_attention.4} parent=5 // pred_fallthru
      _
  $region6: #{vivit_attention.4} parent=0 // loop_footer
    %s13 = sadd.s32 1, %s9
  $region7: #{vivit_attention.4} parent=0 // loop_footer_branch
    %8 = sbr.rel target = $region3
  $region8: #{vivit_attention.4} parent=0 // loop_exit
    _

</llo_original>
